<compile_context>
chip_gen: v6e
topology: v6e:2x2x1
jax: 0.10.0
libtpu: 0.0.40
codegen_flags: <defaults>
</compile_context>

<pallas_src>
import jax
import jax.numpy as jnp
import numpy as np
from jax.experimental import pallas as pl
from jax.experimental.pallas import tpu as pltpu


def _nbytes(shape, dtype):
    return int(np.prod(shape)) * jax.dtypes.canonicalize_dtype(dtype).itemsize


def _vmem_capacity_bytes():
    try:
        return int(pltpu.get_tpu_info().vmem_capacity_bytes)
    except Exception:
        return 64 * 1024 * 1024  # v7x per-TC capacity (smallest across gens)


def multi_head_attention(x, wq, wk, wv, wp, bias, *, compute_dtype=None,
                         batch_tile=None):
    """Causal multi-head self-attention forward.

    x: (B, T, D); wq/wk/wv: (H, D, S); wp: (H*S, D); bias: (D,).
    Matches the PyTorch module: softmax scale = dim_embed**-0.5, causal mask,
    head-major concat, then Linear(H*S -> D) with bias.
    compute_dtype: dtype fed to the projection matmuls (keep f32 on v5e; bf16
    pays off on v6e/v7x only once the matmuls are MXU-bound). Accumulation is
    always f32; output dtype matches x.dtype.
    """
    B, T, D = x.shape
    H, _, S = wq.shape
    assert wp.shape == (H * S, D) and bias.shape == (D,)
    if compute_dtype is None:
        compute_dtype = x.dtype
    cdt = compute_dtype

    # ---- batch tile: largest divisor of B with Bt*T >= ~128 MXU rows; small
    #      problems collapse to a single grid step (no per-step overhead on
    #      v5e/v6e single-TC chips). ----
    if batch_tile is None:
        bt = min(B, max(1, -(-128 // T)))     # ceil(128 / T), capped at B
        while B % bt:
            bt -= 1
        batch_tile = bt
    assert B % batch_tile == 0
    grid = (B // batch_tile,)
    # TODO(synk): on v7x pass batch_tile=B//2 (when B allows) so a 2-step
    # "parallel" grid is sharded across both TensorCores of the chip.

    # ---- host-side (one-time) weight packing ----
    # per-head (H, D, S) -> (D, H*S); concat Q|K|V -> (D, 3*H*S)  (lane dense).
    # The softmax scale is folded into the Q columns here.
    def _fuse(w):
        return jnp.transpose(w, (1, 0, 2)).reshape(D, H * S)

    scale = float(D) ** -0.5                  # module scales by dim_embed**-0.5
    wqkv = jnp.concatenate([_fuse(wq) * scale, _fuse(wk), _fuse(wv)], axis=-1)
    wqkv = wqkv.astype(cdt)                   # (D, 3*H*S)
    wp_c = wp.astype(cdt)                     # (H*S, D), rows head-major
    bias2d = bias.reshape(1, D).astype(jnp.float32)
    # Finite additive causal bias (NaN-safe); must stay f32 (-1e30 overflows bf16).
    row = jnp.arange(T, dtype=jnp.int32)[:, None]
    col = jnp.arange(T, dtype=jnp.int32)[None, :]
    mask_bias = jnp.where(col <= row, 0.0, -1e30).astype(jnp.float32)   # (T, T)
    x_c = x.astype(cdt)

    def kernel(x_ref, wqkv_ref, wp_ref, b_ref, mask_ref, o_ref):
        Bt = x_ref.shape[0]
        # (Bt, T, D) -> (Bt*T, D): leading-dim merge only, layout free.
        x2d = x_ref[...].reshape(Bt * T, D)

        # 1) Fused, lane-dense Q/K/V projection; f32 accumulation.
        qkv = jnp.dot(x2d, wqkv_ref[...],
                      preferred_element_type=jnp.float32)       # (Bt*T, 3*H*S)

        mask = mask_ref[...]                                     # (T, T) f32

        # 2) Per-head attention.  Q/K/V per head are static lane slices of the
        #    fused result (no transpose relayout); softmax stays f32; the
        #    score/PV matmuls are batched over Bt.
        head_outs = []
        for h in range(H):
            qh = qkv[:, h * S:(h + 1) * S].reshape(Bt, T, S)             # pre-scaled
            kh = qkv[:, (H + h) * S:(H + h + 1) * S].reshape(Bt, T, S)
            vh = qkv[:, (2 * H + h) * S:(2 * H + h + 1) * S].reshape(Bt, T, S)
            s = jnp.einsum('bts,bus->btu', qh, kh,
                           preferred_element_type=jnp.float32)           # (Bt, T, T)
            s = s + mask[None, :, :]
            m = jnp.max(s, axis=-1, keepdims=True)
            e = jnp.exp(s - m)
            p = e * pl.reciprocal(jnp.sum(e, axis=-1, keepdims=True), approx=True)
            head_outs.append(jnp.einsum('btu,bus->bts', p, vh,
                                        preferred_element_type=jnp.float32))

        # 3) Head-concat along lanes (matches torch.cat head-major order) and a
        #    single output projection with contraction length H*S, plus bias.
        heads_cat = jnp.concatenate(head_outs, axis=-1)          # (Bt, T, H*S)
        heads_2d = heads_cat.reshape(Bt * T, H * S).astype(wp_ref.dtype)
        proj = jnp.dot(heads_2d, wp_ref[...],
                       preferred_element_type=jnp.float32) + b_ref[...]
        # TODO(synk): for production D < 128, present a lane-dense (Bt, T*D)
        # output slab instead of this (Bt, T, D) store (masked vst at D=32).
        o_ref[...] = proj.reshape(Bt, T, D).astype(o_ref.dtype)

    # ---- VMEM limit derived from actual buffer sizes + chip capacity ----
    bt = batch_tile
    resident = (_nbytes((D, 3 * H * S), cdt) + _nbytes((H * S, D), cdt)
                + _nbytes((1, D), jnp.float32) + _nbytes((T, T), jnp.float32))
    tiles = 2 * (_nbytes((bt, T, D), cdt) + _nbytes((bt, T, D), x.dtype))
    interm = 4 * (_nbytes((bt * T, 3 * H * S), jnp.float32)
                  + 3 * H * _nbytes((bt, T, T), jnp.float32)
                  + 2 * _nbytes((bt * T, H * S), jnp.float32)
                  + _nbytes((bt * T, D), jnp.float32))
    vmem_limit = int(min(max(2 * (resident + tiles + interm), 16 * 1024 * 1024),
                         _vmem_capacity_bytes() // 2))

    out = pl.pallas_call(
        kernel,
        out_shape=jax.ShapeDtypeStruct((B, T, D), x.dtype),
        grid_spec=pltpu.PrefetchScalarGridSpec(
            num_scalar_prefetch=0,
            grid=grid,
            in_specs=[
                pl.BlockSpec((batch_tile, T, D), lambda b: (b, 0, 0)),   # x tile
                pl.BlockSpec((D, 3 * H * S), lambda b: (0, 0)),          # W_qkv (resident)
                pl.BlockSpec((H * S, D), lambda b: (0, 0)),              # W_proj (resident)
                pl.BlockSpec((1, D), lambda b: (0, 0)),                  # bias (resident)
                pl.BlockSpec((T, T), lambda b: (0, 0)),                  # causal bias (resident)
            ],
            out_specs=pl.BlockSpec((batch_tile, T, D), lambda b: (b, 0, 0)),
        ),
        compiler_params=pltpu.CompilerParams(
            dimension_semantics=("parallel",),
            vmem_limit_bytes=vmem_limit,
        ),
        # TODO(synk): for large model dims, add pipeline_mode=pl.Buffered(1) on
        # the constant-index weight specs so residents are not double-buffered
        # (matters on v7x's 64 MiB VMEM).
    )(x_c, wqkv, wp_c, bias2d, mask_bias)
    return out


def _reference(x, wq, wk, wv, wp, bias):
    """Pure-JAX reference mirroring the PyTorch forward exactly."""
    B, T, D = x.shape
    q = jnp.einsum('btd,hds->bhts', x, wq)
    k = jnp.einsum('btd,hds->bhts', x, wk)
    v = jnp.einsum('btd,hds->bhts', x, wv)
    scores = jnp.einsum('bhts,bhus->bhtu', q, k) * (float(D) ** -0.5)
    mask = jnp.tril(jnp.ones((T, T), dtype=bool))
    scores = jnp.where(mask[None, None], scores, -jnp.inf)
    w = jax.nn.softmax(scores, axis=-1)
    out = jnp.einsum('bhtu,bhus->bhts', w, v)                   # (B, H, T, S)
    cat = jnp.transpose(out, (0, 2, 1, 3)).reshape(B, T, -1)
    return cat @ wp + bias[None, None, :]


if __name__ == "__main__":
    # Small shapes consistent with the module's forward.
    B, T = 2, 8            # batch, sequence length (<= max_length)
    dim_embed = 32
    num_heads = 4
    head_size = 8

    key = jax.random.PRNGKey(0)
    kx, kq, kk, kv, kp, kb = jax.random.split(key, 6)

    x = jax.random.normal(kx, (B, T, dim_embed), dtype=jnp.float32)
    # Deterministic synthetic parameters (PyTorch Linear init, bias=False for q/k/v).
    scale = 1.0 / np.sqrt(dim_embed)
    wq = jax.random.uniform(kq, (num_heads, dim_embed, head_size),
                            minval=-scale, maxval=scale, dtype=jnp.float32)
    wk = jax.random.uniform(kk, (num_heads, dim_embed, head_size),
                            minval=-scale, maxval=scale, dtype=jnp.float32)
    wv = jax.random.uniform(kv, (num_heads, dim_embed, head_size),
                            minval=-scale, maxval=scale, dtype=jnp.float32)
    scale_p = 1.0 / np.sqrt(num_heads * head_size)
    wp = jax.random.uniform(kp, (num_heads * head_size, dim_embed),
                            minval=-scale_p, maxval=scale_p, dtype=jnp.float32)
    bias = jax.random.uniform(kb, (dim_embed,),
                              minval=-scale_p, maxval=scale_p, dtype=jnp.float32)

    ref = np.asarray(_reference(x, wq, wk, wv, wp, bias))

    # f32 path (default; only the approx reciprocal differs from the reference).
    out_f32 = multi_head_attention(x, wq, wk, wv, wp, bias)
    out_f32 = jax.block_until_ready(out_f32)
    np.testing.assert_allclose(np.asarray(out_f32), ref, rtol=2e-2, atol=2e-2)

    # bf16 projection path, f32 accumulation (opt-in for v6e / v7x).
    out_bf16 = multi_head_attention(x, wq, wk, wv, wp, bias,
                                    compute_dtype=jnp.bfloat16)
    out_bf16 = jax.block_until_ready(out_bf16)
    np.testing.assert_allclose(np.asarray(out_bf16, dtype=np.float32), ref,
                               rtol=2e-1, atol=1e-1)

    print("KERNEL_OK")
</pallas_src>

<mosaic_0001>
module attributes {stable_mosaic.version = 11 : i64} {
  func.func @kernel(%arg0: i32, %arg1: memref<2x8x32xf32, #tpu.memory_space<vmem>>, %arg2: memref<32x96xf32, #tpu.memory_space<vmem>>, %arg3: memref<32x32xf32, #tpu.memory_space<vmem>>, %arg4: memref<1x32xf32, #tpu.memory_space<vmem>>, %arg5: memref<8x8xf32, #tpu.memory_space<vmem>>, %arg6: memref<2x8x32xf32, #tpu.memory_space<vmem>>) attributes {dimension_semantics = [#tpu.dimension_semantics<parallel>], iteration_bounds = array<i64: 1>, scalar_prefetch = 0 : i64, scratch_operands = 0 : i64, tpu.core_type = #tpu.core_type<tc>, window_params = [{transform_indices = @transform_0, window_bounds = array<i64: 2, 8, 32>}, {pipeline_mode = #tpu.pipeline_mode<synchronous>, transform_indices = @transform_1, window_bounds = array<i64: 32, 96>}, {pipeline_mode = #tpu.pipeline_mode<synchronous>, transform_indices = @transform_2, window_bounds = array<i64: 32, 32>}, {pipeline_mode = #tpu.pipeline_mode<synchronous>, transform_indices = @transform_3, window_bounds = array<i64: 1, 32>}, {pipeline_mode = #tpu.pipeline_mode<synchronous>, transform_indices = @transform_4, window_bounds = array<i64: 8, 8>}, {transform_indices = @transform_5, window_bounds = array<i64: 2, 8, 32>}]} {
    %c0 = arith.constant 0 : index
    %c0_0 = arith.constant 0 : index
    %c0_1 = arith.constant 0 : index
    %0 = vector.load %arg1[%c0, %c0_0, %c0_1] : memref<2x8x32xf32, #tpu.memory_space<vmem>>, vector<2x8x32xf32>
    %1 = vector.shape_cast %0 : vector<2x8x32xf32> to vector<16x32xf32>
    %c0_2 = arith.constant 0 : index
    %c0_3 = arith.constant 0 : index
    %2 = vector.load %arg2[%c0_2, %c0_3] : memref<32x96xf32, #tpu.memory_space<vmem>>, vector<32x96xf32>
    %cst = arith.constant dense<0.000000e+00> : vector<16x96xf32>
    %3 = tpu.matmul %1, %2, %cst {dimension_numbers = #tpu.dot_dimension_numbers<[1], [0], [0], [1], [0, 0, 1, 1], [], []>} : vector<16x32xf32>, vector<32x96xf32>, vector<16x96xf32> -> vector<16x96xf32>
    %c0_4 = arith.constant 0 : index
    %c0_5 = arith.constant 0 : index
    %4 = vector.load %arg5[%c0_4, %c0_5] : memref<8x8xf32, #tpu.memory_space<vmem>>, vector<8x8xf32>
    %5 = vector.extract_strided_slice %3 {offsets = [0, 0], sizes = [16, 8], strides = [1, 1]} : vector<16x96xf32> to vector<16x8xf32>
    %6 = vector.shape_cast %5 : vector<16x8xf32> to vector<2x8x8xf32>
    %7 = vector.extract_strided_slice %3 {offsets = [0, 32], sizes = [16, 8], strides = [1, 1]} : vector<16x96xf32> to vector<16x8xf32>
    %8 = vector.shape_cast %7 : vector<16x8xf32> to vector<2x8x8xf32>
    %9 = vector.extract_strided_slice %3 {offsets = [0, 64], sizes = [16, 8], strides = [1, 1]} : vector<16x96xf32> to vector<16x8xf32>
    %10 = vector.shape_cast %9 : vector<16x8xf32> to vector<2x8x8xf32>
    "tpu.trace_start"() <{level = 10 : i32, message = "bts,bus->btu"}> : () -> ()
    %cst_6 = arith.constant dense<0.000000e+00> : vector<2x8x8xf32>
    %11 = tpu.matmul %6, %8, %cst_6 {dimension_numbers = #tpu.dot_dimension_numbers<[2], [2], [1], [1], [0, 0, 0, 1, 1, 1], [0], [0]>} : vector<2x8x8xf32>, vector<2x8x8xf32>, vector<2x8x8xf32> -> vector<2x8x8xf32>
    "tpu.trace_stop"() : () -> ()
    %12 = vector.shape_cast %4 : vector<8x8xf32> to vector<1x8x8xf32>
    %13 = vector.broadcast %12 : vector<1x8x8xf32> to vector<2x8x8xf32>
    %14 = arith.addf %11, %13 : vector<2x8x8xf32>
    %cst_7 = arith.constant dense<0xFF800000> : vector<2x8xf32>
    %15 = vector.multi_reduction <maximumf>, %14, %cst_7 [2] : vector<2x8x8xf32> to vector<2x8xf32>
    %16 = vector.shape_cast %15 : vector<2x8xf32> to vector<2x8x1xf32>
    %17 = vector.broadcast %16 : vector<2x8x1xf32> to vector<2x8x8xf32>
    %18 = arith.subf %14, %17 : vector<2x8x8xf32>
    %19 = math.exp %18 : vector<2x8x8xf32>
    %cst_8 = arith.constant dense<0.000000e+00> : vector<2x8xf32>
    %20 = vector.multi_reduction <add>, %19, %cst_8 [2] : vector<2x8x8xf32> to vector<2x8xf32>
    %21 = vector.shape_cast %20 : vector<2x8xf32> to vector<2x8x1xf32>
    %22 = tpu.reciprocal %21 {approx = true} : vector<2x8x1xf32> -> vector<2x8x1xf32>
    %23 = vector.broadcast %22 : vector<2x8x1xf32> to vector<2x8x8xf32>
    %24 = arith.mulf %19, %23 : vector<2x8x8xf32>
    "tpu.trace_start"() <{level = 10 : i32, message = "btu,bus->bts"}> : () -> ()
    %cst_9 = arith.constant dense<0.000000e+00> : vector<2x8x8xf32>
    %25 = tpu.matmul %24, %10, %cst_9 {dimension_numbers = #tpu.dot_dimension_numbers<[2], [1], [1], [2], [0, 0, 0, 1, 1, 2], [0], [0]>} : vector<2x8x8xf32>, vector<2x8x8xf32>, vector<2x8x8xf32> -> vector<2x8x8xf32>
    "tpu.trace_stop"() : () -> ()
    %26 = vector.extract_strided_slice %3 {offsets = [0, 8], sizes = [16, 8], strides = [1, 1]} : vector<16x96xf32> to vector<16x8xf32>
    %27 = vector.shape_cast %26 : vector<16x8xf32> to vector<2x8x8xf32>
    %28 = vector.extract_strided_slice %3 {offsets = [0, 40], sizes = [16, 8], strides = [1, 1]} : vector<16x96xf32> to vector<16x8xf32>
    %29 = vector.shape_cast %28 : vector<16x8xf32> to vector<2x8x8xf32>
    %30 = vector.extract_strided_slice %3 {offsets = [0, 72], sizes = [16, 8], strides = [1, 1]} : vector<16x96xf32> to vector<16x8xf32>
    %31 = vector.shape_cast %30 : vector<16x8xf32> to vector<2x8x8xf32>
    "tpu.trace_start"() <{level = 10 : i32, message = "bts,bus->btu"}> : () -> ()
    %cst_10 = arith.constant dense<0.000000e+00> : vector<2x8x8xf32>
    %32 = tpu.matmul %27, %29, %cst_10 {dimension_numbers = #tpu.dot_dimension_numbers<[2], [2], [1], [1], [0, 0, 0, 1, 1, 1], [0], [0]>} : vector<2x8x8xf32>, vector<2x8x8xf32>, vector<2x8x8xf32> -> vector<2x8x8xf32>
    "tpu.trace_stop"() : () -> ()
    %33 = vector.shape_cast %4 : vector<8x8xf32> to vector<1x8x8xf32>
    %34 = vector.broadcast %33 : vector<1x8x8xf32> to vector<2x8x8xf32>
    %35 = arith.addf %32, %34 : vector<2x8x8xf32>
    %cst_11 = arith.constant dense<0xFF800000> : vector<2x8xf32>
    %36 = vector.multi_reduction <maximumf>, %35, %cst_11 [2] : vector<2x8x8xf32> to vector<2x8xf32>
    %37 = vector.shape_cast %36 : vector<2x8xf32> to vector<2x8x1xf32>
    %38 = vector.broadcast %37 : vector<2x8x1xf32> to vector<2x8x8xf32>
    %39 = arith.subf %35, %38 : vector<2x8x8xf32>
    %40 = math.exp %39 : vector<2x8x8xf32>
    %cst_12 = arith.constant dense<0.000000e+00> : vector<2x8xf32>
    %41 = vector.multi_reduction <add>, %40, %cst_12 [2] : vector<2x8x8xf32> to vector<2x8xf32>
    %42 = vector.shape_cast %41 : vector<2x8xf32> to vector<2x8x1xf32>
    %43 = tpu.reciprocal %42 {approx = true} : vector<2x8x1xf32> -> vector<2x8x1xf32>
    %44 = vector.broadcast %43 : vector<2x8x1xf32> to vector<2x8x8xf32>
    %45 = arith.mulf %40, %44 : vector<2x8x8xf32>
    "tpu.trace_start"() <{level = 10 : i32, message = "btu,bus->bts"}> : () -> ()
    %cst_13 = arith.constant dense<0.000000e+00> : vector<2x8x8xf32>
    %46 = tpu.matmul %45, %31, %cst_13 {dimension_numbers = #tpu.dot_dimension_numbers<[2], [1], [1], [2], [0, 0, 0, 1, 1, 2], [0], [0]>} : vector<2x8x8xf32>, vector<2x8x8xf32>, vector<2x8x8xf32> -> vector<2x8x8xf32>
    "tpu.trace_stop"() : () -> ()
    %47 = vector.extract_strided_slice %3 {offsets = [0, 16], sizes = [16, 8], strides = [1, 1]} : vector<16x96xf32> to vector<16x8xf32>
    %48 = vector.shape_cast %47 : vector<16x8xf32> to vector<2x8x8xf32>
    %49 = vector.extract_strided_slice %3 {offsets = [0, 48], sizes = [16, 8], strides = [1, 1]} : vector<16x96xf32> to vector<16x8xf32>
    %50 = vector.shape_cast %49 : vector<16x8xf32> to vector<2x8x8xf32>
    %51 = vector.extract_strided_slice %3 {offsets = [0, 80], sizes = [16, 8], strides = [1, 1]} : vector<16x96xf32> to vector<16x8xf32>
    %52 = vector.shape_cast %51 : vector<16x8xf32> to vector<2x8x8xf32>
    "tpu.trace_start"() <{level = 10 : i32, message = "bts,bus->btu"}> : () -> ()
    %cst_14 = arith.constant dense<0.000000e+00> : vector<2x8x8xf32>
    %53 = tpu.matmul %48, %50, %cst_14 {dimension_numbers = #tpu.dot_dimension_numbers<[2], [2], [1], [1], [0, 0, 0, 1, 1, 1], [0], [0]>} : vector<2x8x8xf32>, vector<2x8x8xf32>, vector<2x8x8xf32> -> vector<2x8x8xf32>
    "tpu.trace_stop"() : () -> ()
    %54 = vector.shape_cast %4 : vector<8x8xf32> to vector<1x8x8xf32>
    %55 = vector.broadcast %54 : vector<1x8x8xf32> to vector<2x8x8xf32>
    %56 = arith.addf %53, %55 : vector<2x8x8xf32>
    %cst_15 = arith.constant dense<0xFF800000> : vector<2x8xf32>
    %57 = vector.multi_reduction <maximumf>, %56, %cst_15 [2] : vector<2x8x8xf32> to vector<2x8xf32>
    %58 = vector.shape_cast %57 : vector<2x8xf32> to vector<2x8x1xf32>
    %59 = vector.broadcast %58 : vector<2x8x1xf32> to vector<2x8x8xf32>
    %60 = arith.subf %56, %59 : vector<2x8x8xf32>
    %61 = math.exp %60 : vector<2x8x8xf32>
    %cst_16 = arith.constant dense<0.000000e+00> : vector<2x8xf32>
    %62 = vector.multi_reduction <add>, %61, %cst_16 [2] : vector<2x8x8xf32> to vector<2x8xf32>
    %63 = vector.shape_cast %62 : vector<2x8xf32> to vector<2x8x1xf32>
    %64 = tpu.reciprocal %63 {approx = true} : vector<2x8x1xf32> -> vector<2x8x1xf32>
    %65 = vector.broadcast %64 : vector<2x8x1xf32> to vector<2x8x8xf32>
    %66 = arith.mulf %61, %65 : vector<2x8x8xf32>
    "tpu.trace_start"() <{level = 10 : i32, message = "btu,bus->bts"}> : () -> ()
    %cst_17 = arith.constant dense<0.000000e+00> : vector<2x8x8xf32>
    %67 = tpu.matmul %66, %52, %cst_17 {dimension_numbers = #tpu.dot_dimension_numbers<[2], [1], [1], [2], [0, 0, 0, 1, 1, 2], [0], [0]>} : vector<2x8x8xf32>, vector<2x8x8xf32>, vector<2x8x8xf32> -> vector<2x8x8xf32>
    "tpu.trace_stop"() : () -> ()
    %68 = vector.extract_strided_slice %3 {offsets = [0, 24], sizes = [16, 8], strides = [1, 1]} : vector<16x96xf32> to vector<16x8xf32>
    %69 = vector.shape_cast %68 : vector<16x8xf32> to vector<2x8x8xf32>
    %70 = vector.extract_strided_slice %3 {offsets = [0, 56], sizes = [16, 8], strides = [1, 1]} : vector<16x96xf32> to vector<16x8xf32>
    %71 = vector.shape_cast %70 : vector<16x8xf32> to vector<2x8x8xf32>
    %72 = vector.extract_strided_slice %3 {offsets = [0, 88], sizes = [16, 8], strides = [1, 1]} : vector<16x96xf32> to vector<16x8xf32>
    %73 = vector.shape_cast %72 : vector<16x8xf32> to vector<2x8x8xf32>
    "tpu.trace_start"() <{level = 10 : i32, message = "bts,bus->btu"}> : () -> ()
    %cst_18 = arith.constant dense<0.000000e+00> : vector<2x8x8xf32>
    %74 = tpu.matmul %69, %71, %cst_18 {dimension_numbers = #tpu.dot_dimension_numbers<[2], [2], [1], [1], [0, 0, 0, 1, 1, 1], [0], [0]>} : vector<2x8x8xf32>, vector<2x8x8xf32>, vector<2x8x8xf32> -> vector<2x8x8xf32>
    "tpu.trace_stop"() : () -> ()
    %75 = vector.shape_cast %4 : vector<8x8xf32> to vector<1x8x8xf32>
    %76 = vector.broadcast %75 : vector<1x8x8xf32> to vector<2x8x8xf32>
    %77 = arith.addf %74, %76 : vector<2x8x8xf32>
    %cst_19 = arith.constant dense<0xFF800000> : vector<2x8xf32>
    %78 = vector.multi_reduction <maximumf>, %77, %cst_19 [2] : vector<2x8x8xf32> to vector<2x8xf32>
    %79 = vector.shape_cast %78 : vector<2x8xf32> to vector<2x8x1xf32>
    %80 = vector.broadcast %79 : vector<2x8x1xf32> to vector<2x8x8xf32>
    %81 = arith.subf %77, %80 : vector<2x8x8xf32>
    %82 = math.exp %81 : vector<2x8x8xf32>
    %cst_20 = arith.constant dense<0.000000e+00> : vector<2x8xf32>
    %83 = vector.multi_reduction <add>, %82, %cst_20 [2] : vector<2x8x8xf32> to vector<2x8xf32>
    %84 = vector.shape_cast %83 : vector<2x8xf32> to vector<2x8x1xf32>
    %85 = tpu.reciprocal %84 {approx = true} : vector<2x8x1xf32> -> vector<2x8x1xf32>
    %86 = vector.broadcast %85 : vector<2x8x1xf32> to vector<2x8x8xf32>
    %87 = arith.mulf %82, %86 : vector<2x8x8xf32>
    "tpu.trace_start"() <{level = 10 : i32, message = "btu,bus->bts"}> : () -> ()
    %cst_21 = arith.constant dense<0.000000e+00> : vector<2x8x8xf32>
    %88 = tpu.matmul %87, %73, %cst_21 {dimension_numbers = #tpu.dot_dimension_numbers<[2], [1], [1], [2], [0, 0, 0, 1, 1, 2], [0], [0]>} : vector<2x8x8xf32>, vector<2x8x8xf32>, vector<2x8x8xf32> -> vector<2x8x8xf32>
    "tpu.trace_stop"() : () -> ()
    %89 = tpu.concatenate %25, %46, %67, %88 in 2 : vector<2x8x8xf32>, vector<2x8x8xf32>, vector<2x8x8xf32>, vector<2x8x8xf32> -> vector<2x8x32xf32>
    %90 = vector.shape_cast %89 : vector<2x8x32xf32> to vector<16x32xf32>
    %c0_22 = arith.constant 0 : index
    %c0_23 = arith.constant 0 : index
    %91 = vector.load %arg3[%c0_22, %c0_23] : memref<32x32xf32, #tpu.memory_space<vmem>>, vector<32x32xf32>
    %cst_24 = arith.constant dense<0.000000e+00> : vector<16x32xf32>
    %92 = tpu.matmul %90, %91, %cst_24 {dimension_numbers = #tpu.dot_dimension_numbers<[1], [0], [0], [1], [0, 0, 1, 1], [], []>} : vector<16x32xf32>, vector<32x32xf32>, vector<16x32xf32> -> vector<16x32xf32>
    %c0_25 = arith.constant 0 : index
    %c0_26 = arith.constant 0 : index
    %93 = vector.load %arg4[%c0_25, %c0_26] : memref<1x32xf32, #tpu.memory_space<vmem>>, vector<1x32xf32>
    %94 = vector.broadcast %93 : vector<1x32xf32> to vector<16x32xf32>
    %95 = arith.addf %92, %94 : vector<16x32xf32>
    %96 = vector.shape_cast %95 : vector<16x32xf32> to vector<2x8x32xf32>
    %c0_27 = arith.constant 0 : index
    %c0_28 = arith.constant 0 : index
    %c0_29 = arith.constant 0 : index
    %97 = vector.load %arg6[%c0_27, %c0_28, %c0_29] : memref<2x8x32xf32, #tpu.memory_space<vmem>>, vector<2x8x32xf32>
    tpu.vector_store %arg6[%c0_27, %c0_28, %c0_29], %96 {strides = array<i32>} : memref<2x8x32xf32, #tpu.memory_space<vmem>>, vector<2x8x32xf32>,
    return
  }
  func.func @transform_0(%arg0: i32) -> (i32, i32, i32) {
    %c0_i32 = arith.constant 0 : i32
    %c0_i32_0 = arith.constant 0 : i32
    %c0_i32_1 = arith.constant 0 : i32
    return %arg0, %c0_i32, %c0_i32_0 : i32, i32, i32
  }
  func.func @transform_1(%arg0: i32) -> (i32, i32) {
    %c0_i32 = arith.constant 0 : i32
    %c0_i32_0 = arith.constant 0 : i32
    %c0_i32_1 = arith.constant 0 : i32
    return %c0_i32, %c0_i32_0 : i32, i32
  }
  func.func @transform_2(%arg0: i32) -> (i32, i32) {
    %c0_i32 = arith.constant 0 : i32
    %c0_i32_0 = arith.constant 0 : i32
    %c0_i32_1 = arith.constant 0 : i32
    return %c0_i32, %c0_i32_0 : i32, i32
  }
  func.func @transform_3(%arg0: i32) -> (i32, i32) {
    %c0_i32 = arith.constant 0 : i32
    %c0_i32_0 = arith.constant 0 : i32
    %c0_i32_1 = arith.constant 0 : i32
    return %c0_i32, %c0_i32_0 : i32, i32
  }
  func.func @transform_4(%arg0: i32) -> (i32, i32) {
    %c0_i32 = arith.constant 0 : i32
    %c0_i32_0 = arith.constant 0 : i32
    %c0_i32_1 = arith.constant 0 : i32
    return %c0_i32, %c0_i32_0 : i32, i32
  }
  func.func @transform_5(%arg0: i32) -> (i32, i32, i32) {
    %c0_i32 = arith.constant 0 : i32
    %c0_i32_0 = arith.constant 0 : i32
    %c0_i32_1 = arith.constant 0 : i32
    return %arg0, %c0_i32, %c0_i32_0 : i32, i32, i32
  }
}

</mosaic_0001>

<llo_original>
// kernel: tpu_custom_call.1
$region0: #{tpu_custom_call.1}
  #allocation0 [shape = 'u32[]', space=smem, size = 0x4, offset = 0x4, fixed_abs, tag = 'smem constant byte address 0x4 - core index']
  #allocation1 [shape = 'u32[144,128]{1,0:T(1,128)}', space=vmem, size = 0x12000, scoped, tag = 'internal scratch']
  %s0 = inlined_call_operand.hbm [shape: f32[2,8,32], index: 0, kind: input, shape index: {}]
  %s1 = inlined_call_operand.hbm [shape: f32[32,96], index: 1, kind: input, shape index: {}]
  %s2 = inlined_call_operand.hbm [shape: f32[32,32], index: 2, kind: input, shape index: {}]
  %s3 = inlined_call_operand.vmem [shape: f32[1,32], index: 3, kind: input, shape index: {}]
  %s4 = inlined_call_operand.hbm [shape: f32[8,8], index: 4, kind: input, shape index: {}]
  %s5 = inlined_call_operand.hbm [shape: f32[2,8,32], index: 5, kind: output, shape index: {}]
  %s6 = sld [smem:[#allocation0]]
  $region46: #{tpu_custom_call.1} parent=0
    _
  %s8 = ssub.s32 1, %s6
  %s9 = scalar_select 0, %s8, %s6
  $region1: #{tpu_custom_call.1} parent=0
    #allocation2 [shape = 'u8[8192]{0}', space=vmem, size = 0x2000, scoped, tag = 'input window, operand 0, single buffered']
    #allocation3 [shape = 's32[1]{0}', space=sflag, size = 0x4, scoped, tag = 'scoped memory for tpu_custom_call.1']
    #allocation4 [shape = 's32[1]{0}', space=sflag, size = 0x4, scoped, tag = 'scoped memory for tpu_custom_call.1']
    #allocation5 [shape = 'u8[16384]{0}', space=vmem, size = 0x4000, scoped, tag = 'input window, operand 1, single buffered']
    #allocation6 [shape = 's32[1]{0}', space=sflag, size = 0x4, scoped, tag = 'scoped memory for tpu_custom_call.1']
    #allocation7 [shape = 'u8[16384]{0}', space=vmem, size = 0x4000, scoped, tag = 'input window, operand 2, single buffered']
    #allocation8 [shape = 'u8[4096]{0}', space=vmem, size = 0x1000, scoped, tag = 'input window, operand 4, single buffered']
    #allocation9 [shape = 's32[1]{0}', space=sflag, size = 0x4, scoped, tag = 'scoped memory for tpu_custom_call.1']
    #allocation10 [shape = 'u8[8192]{0}', space=vmem, size = 0x2000, scoped, tag = 'output window, operand 0, single buffered']
    %10 = vsyncpa [#allocation3], 0
    %11 = vsyncpa [#allocation6], 0
    %12 = vsyncpa [#allocation9], 0
    %13 = vsyncpa [#allocation4], 0
    // Predicated region
    $region2: #{tpu_custom_call.1} parent=1 // pred_check
      _
    $region3: #{tpu_custom_call.1} parent=1 // pred_check_branch
      %15 = sbr.rel (0) target = $region5
    $region4: #{tpu_custom_call.1} parent=1 // pred_region
      %s17 = ssub.s32 256, 256
      %18 = vsyncadd [#allocation3], %s17
      %s19 = sshll.u32 [#allocation2], 4
      %s20 = int_to_ptr.vmem [resolvable:$true] %s19
      %25 = dma.hbm_to_vmem [thread:$0]  %s0, 256, %s20, [#allocation3], 128, 128, 8
    $region5: #{tpu_custom_call.1} parent=1 // pred_fallthru
      _
    // Predicated region
    $region6: #{tpu_custom_call.1} parent=1 // pred_check
      _
    $region7: #{tpu_custom_call.1} parent=1 // pred_check_branch
      %27 = sbr.rel (0) target = $region9
    $region8: #{tpu_custom_call.1} parent=1 // pred_region
      %s29 = ssub.s32 512, 512
      %30 = vsyncadd [#allocation6], %s29
      %s31 = sshll.u32 [#allocation5], 4
      %s32 = int_to_ptr.vmem [resolvable:$true] %s31
      %37 = dma.hbm_to_vmem [thread:$0]  %s1, 512, %s32, [#allocation6], 128, 128, 8
    $region9: #{tpu_custom_call.1} parent=1 // pred_fallthru
      _
    // Predicated region
    $region10: #{tpu_custom_call.1} parent=1 // pred_check
      _
    $region11: #{tpu_custom_call.1} parent=1 // pred_check_branch
      %39 = sbr.rel (0) target = $region13
    $region12: #{tpu_custom_call.1} parent=1 // pred_region
      %s41 = ssub.s32 512, 512
      %42 = vsyncadd [#allocation6], %s41
      %s43 = sshll.u32 [#allocation7], 4
      %s44 = int_to_ptr.vmem [resolvable:$true] %s43
      %49 = dma.hbm_to_vmem [thread:$0]  %s2, 512, %s44, [#allocation6], 128, 128, 8
    $region13: #{tpu_custom_call.1} parent=1 // pred_fallthru
      _
    // Predicated region
    $region14: #{tpu_custom_call.1} parent=1 // pred_check
      _
    $region15: #{tpu_custom_call.1} parent=1 // pred_check_branch
      %51 = sbr.rel (0) target = $region17
    $region16: #{tpu_custom_call.1} parent=1 // pred_region
      _
    $region17: #{tpu_custom_call.1} parent=1 // pred_fallthru
      _
    // Predicated region
    $region18: #{tpu_custom_call.1} parent=1 // pred_check
      _
    $region19: #{tpu_custom_call.1} parent=1 // pred_check_branch
      %53 = sbr.rel (0) target = $region21
    $region20: #{tpu_custom_call.1} parent=1 // pred_region
      %s55 = ssub.s32 128, 128
      %56 = vsyncadd [#allocation9], %s55
      %s58 = sshll.u32 [#allocation8], 4
      %s59 = int_to_ptr.vmem [resolvable:$true] %s58
      %61 = dma.hbm_to_vmem [thread:$0]  %s4, 128, %s59, [#allocation9]
    $region21: #{tpu_custom_call.1} parent=1 // pred_fallthru
      _
    // Predicated region
    $region22: #{tpu_custom_call.1} parent=1 // pred_check
      _
    $region23: #{tpu_custom_call.1} parent=1 // pred_check_branch
      %63 = sbr.rel (0) target = $region25
    $region24: #{tpu_custom_call.1} parent=1 // pred_region
      %64 = dma.done [#allocation3], 256
    $region25: #{tpu_custom_call.1} parent=1 // pred_fallthru
      _
    // Predicated region
    $region26: #{tpu_custom_call.1} parent=1 // pred_check
      _
    $region27: #{tpu_custom_call.1} parent=1 // pred_check_branch
      %66 = sbr.rel (0) target = $region29
    $region28: #{tpu_custom_call.1} parent=1 // pred_region
      %67 = dma.done [#allocation6], 512
    $region29: #{tpu_custom_call.1} parent=1 // pred_fallthru
      _
    // Predicated region
    $region30: #{tpu_custom_call.1} parent=1 // pred_check
      _
    $region31: #{tpu_custom_call.1} parent=1 // pred_check_branch
      %69 = sbr.rel (0) target = $region33
    $region32: #{tpu_custom_call.1} parent=1 // pred_region
      %70 = dma.done [#allocation6], 512
    $region33: #{tpu_custom_call.1} parent=1 // pred_fallthru
      _
    // Predicated region
    $region34: #{tpu_custom_call.1} parent=1 // pred_check
      _
    $region35: #{tpu_custom_call.1} parent=1 // pred_check_branch
      %72 = sbr.rel (0) target = $region37
    $region36: #{tpu_custom_call.1} parent=1 // pred_region
      %73 = dma.done [#allocation9], 128
    $region37: #{tpu_custom_call.1} parent=1 // pred_fallthru
      _
    %v74 = vld [vmem:[#allocation2] sm:$0xff]
    %v75 = vld [vmem:[#allocation2 + $0x8] sm:$0xff]
    %v76 = vld [vmem:[#allocation5] sm:$0xff]
    %v77 = vld [vmem:[#allocation5 + $0x8] sm:$0xff]
    %v78 = vld [vmem:[#allocation5 + $0x10] sm:$0xff]
    %v79 = vld [vmem:[#allocation5 + $0x18] sm:$0xff]
    %vm80 = vcmask 261120
    %v82 = vsel %vm80, %v74, 0
    %v85 = vsel %vm80, %v75, 0
    %87 = vmatprep.subr.mxu0 0.0
    %88 = vmatpush1.msra.mxu0 0.0
    %89 = vmatprep.subr.mxu0 0.0
    %90 = vmatpush1.msra.mxu0 0.0
    %91 = vmatprep.subr.mxu0 0.0
    %92 = vmatpush1.msra.mxu0 0.0
    %93 = vmatprep.subr.mxu0 0.0
    %94 = vmatpush1.msra.mxu0 0.0
    %95 = vmatprep.subr.mxu0 0.0
    %96 = vmatpush1.msra.mxu0 0.0
    %97 = vmatprep.subr.mxu0 0.0
    %98 = vmatpush1.msra.mxu0 0.0
    %99 = vmatprep.subr.mxu0 0.0
    %100 = vmatpush1.msra.mxu0 0.0
    %101 = vmatprep.subr.mxu0 0.0
    %102 = vmatpush1.msra.mxu0 0.0
    %103 = vmatprep.subr.mxu0 0.0
    %104 = vmatpush1.msra.mxu0 0.0
    %105 = vmatprep.subr.mxu0 0.0
    %106 = vmatpush1.msra.mxu0 0.0
    %107 = vmatprep.subr.mxu0 0.0
    %108 = vmatpush1.msra.mxu0 0.0
    %109 = vmatprep.subr.mxu0 0.0
    %110 = vmatpush1.msra.mxu0 0.0
    %111 = vmatprep.subr.mxu0 0.0
    %112 = vmatpush1.msra.mxu0 %v79
    %113 = vmatprep.subr.mxu0 0.0
    %114 = vmatpush1.msra.mxu0 %v78
    %115 = vmatprep.subr.mxu0 0.0
    %116 = vmatpush1.msra.mxu0 %v77
    %117 = vmatprep.subr.mxu0 0.0
    %118 = vmatpush1.msra.mxu0 %v76
    %119 = vmatprep.subr.mxu0 0.0
    %120 = vmatpush2.msra.mxu0 0.0
    %121 = vmatprep.subr.mxu0 0.0
    %122 = vmatpush2.msra.mxu0 0.0
    %123 = vmatprep.subr.mxu0 0.0
    %124 = vmatpush2.msra.mxu0 0.0
    %125 = vmatprep.subr.mxu0 0.0
    %126 = vmatpush2.msra.mxu0 0.0
    %127 = vmatprep.subr.mxu0 0.0
    %128 = vmatpush2.msra.mxu0 0.0
    %129 = vmatprep.subr.mxu0 0.0
    %130 = vmatpush2.msra.mxu0 0.0
    %131 = vmatprep.subr.mxu0 0.0
    %132 = vmatpush2.msra.mxu0 0.0
    %133 = vmatprep.subr.mxu0 0.0
    %134 = vmatpush2.msra.mxu0 0.0
    %135 = vmatprep.subr.mxu0 0.0
    %136 = vmatpush2.msra.mxu0 0.0
    %137 = vmatprep.subr.mxu0 0.0
    %138 = vmatpush2.msra.mxu0 0.0
    %139 = vmatprep.subr.mxu0 0.0
    %140 = vmatpush2.msra.mxu0 0.0
    %141 = vmatprep.subr.mxu0 0.0
    %142 = vmatpush2.msra.mxu0 0.0
    %143 = vmatprep.subr.mxu0 0.0
    %144 = vmatpush2.msra.mxu0 0.0
    %145 = vmatprep.subr.mxu0 0.0
    %146 = vmatpush2.msra.mxu0 0.0
    %147 = vmatprep.subr.mxu0 0.0
    %148 = vmatpush2.msra.mxu0 0.0
    %149 = vmatprep.subr.mxu0 0.0
    %150 = vmatpush2.msra.mxu0 0.0
    %151 = vmatprep.mubr.f32.mxu0 0.0
    %152 = vmatmul.mubr.f32.gmra.mxu0 %v82
    %v153 = vpop.f32.mrf.mxu0
    %v154 = vadd.f32 0.0, %v153
    %v155 = vpop.f32.mrf.mxu0
    %156 = vmatprep.mubr.f32.mxu0 0.0
    %157 = vmatmul.mubr.f32.gmra.mxu0 %v85
    %v158 = vpop.f32.mrf.mxu0
    %v159 = vadd.f32 0.0, %v158
    %v160 = vpop.f32.mrf.mxu0
    %161 = vdwg.mxu0
    %v162 = vld [vmem:[#allocation8] sm:$0xff]
    %164 = vrot.lane.b32.xlu0 %v154, 96
    %v165 = vpop.permute.xlu0 %164
    %vm166 = vcmask 64512
    %v167 = vsel %vm166, %v154, 0
    %v169 = vsel %vm166, %v165, 0
    %171 = vmatprep.subr.mxu0 0.0
    %172 = vmatpush1.xpose.msra.mxu0 0.0
    %173 = vmatprep.subr.mxu0 0.0
    %174 = vmatpush1.xpose.msra.mxu0 0.0
    %175 = vmatprep.subr.mxu0 0.0
    %176 = vmatpush1.xpose.msra.mxu0 0.0
    %177 = vmatprep.subr.mxu0 0.0
    %178 = vmatpush1.xpose.msra.mxu0 0.0
    %179 = vmatprep.subr.mxu0 0.0
    %180 = vmatpush1.xpose.msra.mxu0 0.0
    %181 = vmatprep.subr.mxu0 0.0
    %182 = vmatpush1.xpose.msra.mxu0 0.0
    %183 = vmatprep.subr.mxu0 0.0
    %184 = vmatpush1.xpose.msra.mxu0 0.0
    %185 = vmatprep.subr.mxu0 0.0
    %186 = vmatpush1.xpose.msra.mxu0 0.0
    %187 = vmatprep.subr.mxu0 0.0
    %188 = vmatpush1.xpose.msra.mxu0 0.0
    %189 = vmatprep.subr.mxu0 0.0
    %190 = vmatpush1.xpose.msra.mxu0 0.0
    %191 = vmatprep.subr.mxu0 0.0
    %192 = vmatpush1.xpose.msra.mxu0 0.0
    %193 = vmatprep.subr.mxu0 0.0
    %194 = vmatpush1.xpose.msra.mxu0 0.0
    %195 = vmatprep.subr.mxu0 0.0
    %196 = vmatpush1.xpose.msra.mxu0 0.0
    %197 = vmatprep.subr.mxu0 0.0
    %198 = vmatpush1.xpose.msra.mxu0 0.0
    %199 = vmatprep.subr.mxu0 0.0
    %200 = vmatpush1.xpose.msra.mxu0 0.0
    %201 = vmatprep.subr.mxu0 0.0
    %202 = vmatpush1.xpose.msra.mxu0 %v169
    %203 = vmatprep.subr.mxu0 0.0
    %204 = vmatpush2.xpose.msra.mxu0 0.0
    %205 = vmatprep.subr.mxu0 0.0
    %206 = vmatpush2.xpose.msra.mxu0 0.0
    %207 = vmatprep.subr.mxu0 0.0
    %208 = vmatpush2.xpose.msra.mxu0 0.0
    %209 = vmatprep.subr.mxu0 0.0
    %210 = vmatpush2.xpose.msra.mxu0 0.0
    %211 = vmatprep.subr.mxu0 0.0
    %212 = vmatpush2.xpose.msra.mxu0 0.0
    %213 = vmatprep.subr.mxu0 0.0
    %214 = vmatpush2.xpose.msra.mxu0 0.0
    %215 = vmatprep.subr.mxu0 0.0
    %216 = vmatpush2.xpose.msra.mxu0 0.0
    %217 = vmatprep.subr.mxu0 0.0
    %218 = vmatpush2.xpose.msra.mxu0 0.0
    %219 = vmatprep.subr.mxu0 0.0
    %220 = vmatpush2.xpose.msra.mxu0 0.0
    %221 = vmatprep.subr.mxu0 0.0
    %222 = vmatpush2.xpose.msra.mxu0 0.0
    %223 = vmatprep.subr.mxu0 0.0
    %224 = vmatpush2.xpose.msra.mxu0 0.0
    %225 = vmatprep.subr.mxu0 0.0
    %226 = vmatpush2.xpose.msra.mxu0 0.0
    %227 = vmatprep.subr.mxu0 0.0
    %228 = vmatpush2.xpose.msra.mxu0 0.0
    %229 = vmatprep.subr.mxu0 0.0
    %230 = vmatpush2.xpose.msra.mxu0 0.0
    %231 = vmatprep.subr.mxu0 0.0
    %232 = vmatpush2.xpose.msra.mxu0 0.0
    %233 = vmatprep.subr.mxu0 0.0
    %234 = vmatpush2.xpose.msra.mxu0 0.0
    %235 = vmatprep.mubr.f32.mxu0 0.0
    %236 = vmatmul.mubr.f32.gmra.mxu0 %v167
    %v237 = vpop.f32.mrf.mxu0
    %v238 = vadd.f32 %v162, %v237
    %v239 = vpop.f32.mrf.mxu0
    %240 = vdwg.mxu0
    %242 = vrot.lane.b32.xlu0 %v159, 96
    %v243 = vpop.permute.xlu0 %242
    %v244 = vsel %vm166, %v159, 0
    %v246 = vsel %vm166, %v243, 0
    %248 = vmatprep.subr.mxu0 0.0
    %249 = vmatpush1.xpose.msra.mxu0 0.0
    %250 = vmatprep.subr.mxu0 0.0
    %251 = vmatpush1.xpose.msra.mxu0 0.0
    %252 = vmatprep.subr.mxu0 0.0
    %253 = vmatpush1.xpose.msra.mxu0 0.0
    %254 = vmatprep.subr.mxu0 0.0
    %255 = vmatpush1.xpose.msra.mxu0 0.0
    %256 = vmatprep.subr.mxu0 0.0
    %257 = vmatpush1.xpose.msra.mxu0 0.0
    %258 = vmatprep.subr.mxu0 0.0
    %259 = vmatpush1.xpose.msra.mxu0 0.0
    %260 = vmatprep.subr.mxu0 0.0
    %261 = vmatpush1.xpose.msra.mxu0 0.0
    %262 = vmatprep.subr.mxu0 0.0
    %263 = vmatpush1.xpose.msra.mxu0 0.0
    %264 = vmatprep.subr.mxu0 0.0
    %265 = vmatpush1.xpose.msra.mxu0 0.0
    %266 = vmatprep.subr.mxu0 0.0
    %267 = vmatpush1.xpose.msra.mxu0 0.0
    %268 = vmatprep.subr.mxu0 0.0
    %269 = vmatpush1.xpose.msra.mxu0 0.0
    %270 = vmatprep.subr.mxu0 0.0
    %271 = vmatpush1.xpose.msra.mxu0 0.0
    %272 = vmatprep.subr.mxu0 0.0
    %273 = vmatpush1.xpose.msra.mxu0 0.0
    %274 = vmatprep.subr.mxu0 0.0
    %275 = vmatpush1.xpose.msra.mxu0 0.0
    %276 = vmatprep.subr.mxu0 0.0
    %277 = vmatpush1.xpose.msra.mxu0 0.0
    %278 = vmatprep.subr.mxu0 0.0
    %279 = vmatpush1.xpose.msra.mxu0 %v246
    %280 = vmatprep.subr.mxu0 0.0
    %281 = vmatpush2.xpose.msra.mxu0 0.0
    %282 = vmatprep.subr.mxu0 0.0
    %283 = vmatpush2.xpose.msra.mxu0 0.0
    %284 = vmatprep.subr.mxu0 0.0
    %285 = vmatpush2.xpose.msra.mxu0 0.0
    %286 = vmatprep.subr.mxu0 0.0
    %287 = vmatpush2.xpose.msra.mxu0 0.0
    %288 = vmatprep.subr.mxu0 0.0
    %289 = vmatpush2.xpose.msra.mxu0 0.0
    %290 = vmatprep.subr.mxu0 0.0
    %291 = vmatpush2.xpose.msra.mxu0 0.0
    %292 = vmatprep.subr.mxu0 0.0
    %293 = vmatpush2.xpose.msra.mxu0 0.0
    %294 = vmatprep.subr.mxu0 0.0
    %295 = vmatpush2.xpose.msra.mxu0 0.0
    %296 = vmatprep.subr.mxu0 0.0
    %297 = vmatpush2.xpose.msra.mxu0 0.0
    %298 = vmatprep.subr.mxu0 0.0
    %299 = vmatpush2.xpose.msra.mxu0 0.0
    %300 = vmatprep.subr.mxu0 0.0
    %301 = vmatpush2.xpose.msra.mxu0 0.0
    %302 = vmatprep.subr.mxu0 0.0
    %303 = vmatpush2.xpose.msra.mxu0 0.0
    %304 = vmatprep.subr.mxu0 0.0
    %305 = vmatpush2.xpose.msra.mxu0 0.0
    %306 = vmatprep.subr.mxu0 0.0
    %307 = vmatpush2.xpose.msra.mxu0 0.0
    %308 = vmatprep.subr.mxu0 0.0
    %309 = vmatpush2.xpose.msra.mxu0 0.0
    %310 = vmatprep.subr.mxu0 0.0
    %311 = vmatpush2.xpose.msra.mxu0 0.0
    %312 = vmatprep.mubr.f32.mxu0 0.0
    %313 = vmatmul.mubr.f32.gmra.mxu0 %v244
    %v314 = vpop.f32.mrf.mxu0
    %v315 = vadd.f32 %v162, %v314
    %v316 = vpop.f32.mrf.mxu0
    %317 = vdwg.mxu0
    %v318 = vsel %vm166, %v238, -inf
    %319 = vmax.xlane.f32.xlu0 %v318
    %v320 = vpop.xlane.xlu0 %319
    %v321 = vsel %vm166, %v315, -inf
    %322 = vmax.xlane.f32.xlu0 %v321
    %v323 = vpop.xlane.xlu0 %322
    %v324 = vsub.f32 %v238, %v320
    %v325 = vsub.f32 %v315, %v323
    %v326 = vmul.f32 %v324, 1.442695
    %v327 = vpow.pop %v326
    %v328 = vmul.f32 %v325, 1.442695
    %v329 = vpow.pop %v328
    %v330 = vsel %vm166, %v327, 0.0
    %331 = vadd.xlane.f32.xlu0 %v330
    %v332 = vpop.xlane.xlu0 %331
    %v333 = vsel %vm166, %v329, 0.0
    %334 = vadd.xlane.f32.xlu0 %v333
    %v335 = vpop.xlane.xlu0 %334
    %v336 = vrcp.pop %v332
    %v337 = vrcp.pop %v335
    %v338 = vmul.f32 %v327, %v336
    %v339 = vmul.f32 %v329, %v337
    %340 = vrot.lane.b32.xlu0 %v154, 64
    %v341 = vpop.permute.xlu0 %340
    %v344 = vsel %vm166, %v338, 0
    %346 = vmatprep.subr.mxu0 0.0
    %347 = vmatpush1.msra.mxu0 0.0
    %348 = vmatprep.subr.mxu0 0.0
    %349 = vmatpush1.msra.mxu0 0.0
    %350 = vmatprep.subr.mxu0 0.0
    %351 = vmatpush1.msra.mxu0 0.0
    %352 = vmatprep.subr.mxu0 0.0
    %353 = vmatpush1.msra.mxu0 0.0
    %354 = vmatprep.subr.mxu0 0.0
    %355 = vmatpush1.msra.mxu0 0.0
    %356 = vmatprep.subr.mxu0 0.0
    %357 = vmatpush1.msra.mxu0 0.0
    %358 = vmatprep.subr.mxu0 0.0
    %359 = vmatpush1.msra.mxu0 0.0
    %360 = vmatprep.subr.mxu0 0.0
    %361 = vmatpush1.msra.mxu0 0.0
    %362 = vmatprep.subr.mxu0 0.0
    %363 = vmatpush1.msra.mxu0 0.0
    %364 = vmatprep.subr.mxu0 0.0
    %365 = vmatpush1.msra.mxu0 0.0
    %366 = vmatprep.subr.mxu0 0.0
    %367 = vmatpush1.msra.mxu0 0.0
    %368 = vmatprep.subr.mxu0 0.0
    %369 = vmatpush1.msra.mxu0 0.0
    %370 = vmatprep.subr.mxu0 0.0
    %371 = vmatpush1.msra.mxu0 0.0
    %372 = vmatprep.subr.mxu0 0.0
    %373 = vmatpush1.msra.mxu0 0.0
    %374 = vmatprep.subr.mxu0 0.0
    %375 = vmatpush1.msra.mxu0 0.0
    %376 = vmatprep.subr.mxu0 0.0
    %377 = vmatpush1.msra.mxu0 %v341
    %378 = vmatprep.subr.mxu0 0.0
    %379 = vmatpush2.msra.mxu0 0.0
    %380 = vmatprep.subr.mxu0 0.0
    %381 = vmatpush2.msra.mxu0 0.0
    %382 = vmatprep.subr.mxu0 0.0
    %383 = vmatpush2.msra.mxu0 0.0
    %384 = vmatprep.subr.mxu0 0.0
    %385 = vmatpush2.msra.mxu0 0.0
    %386 = vmatprep.subr.mxu0 0.0
    %387 = vmatpush2.msra.mxu0 0.0
    %388 = vmatprep.subr.mxu0 0.0
    %389 = vmatpush2.msra.mxu0 0.0
    %390 = vmatprep.subr.mxu0 0.0
    %391 = vmatpush2.msra.mxu0 0.0
    %392 = vmatprep.subr.mxu0 0.0
    %393 = vmatpush2.msra.mxu0 0.0
    %394 = vmatprep.subr.mxu0 0.0
    %395 = vmatpush2.msra.mxu0 0.0
    %396 = vmatprep.subr.mxu0 0.0
    %397 = vmatpush2.msra.mxu0 0.0
    %398 = vmatprep.subr.mxu0 0.0
    %399 = vmatpush2.msra.mxu0 0.0
    %400 = vmatprep.subr.mxu0 0.0
    %401 = vmatpush2.msra.mxu0 0.0
    %402 = vmatprep.subr.mxu0 0.0
    %403 = vmatpush2.msra.mxu0 0.0
    %404 = vmatprep.subr.mxu0 0.0
    %405 = vmatpush2.msra.mxu0 0.0
    %406 = vmatprep.subr.mxu0 0.0
    %407 = vmatpush2.msra.mxu0 0.0
    %408 = vmatprep.subr.mxu0 0.0
    %409 = vmatpush2.msra.mxu0 0.0
    %410 = vmatprep.mubr.f32.mxu0 0.0
    %411 = vmatmul.mubr.f32.gmra.mxu0 %v344
    %v412 = vpop.f32.mrf.mxu0
    %v413 = vadd.f32 0.0, %v412
    %v414 = vpop.f32.mrf.mxu0
    %415 = vdwg.mxu0
    %416 = vrot.lane.b32.xlu0 %v159, 64
    %v417 = vpop.permute.xlu0 %416
    %v420 = vsel %vm166, %v339, 0
    %422 = vmatprep.subr.mxu0 0.0
    %423 = vmatpush1.msra.mxu0 0.0
    %424 = vmatprep.subr.mxu0 0.0
    %425 = vmatpush1.msra.mxu0 0.0
    %426 = vmatprep.subr.mxu0 0.0
    %427 = vmatpush1.msra.mxu0 0.0
    %428 = vmatprep.subr.mxu0 0.0
    %429 = vmatpush1.msra.mxu0 0.0
    %430 = vmatprep.subr.mxu0 0.0
    %431 = vmatpush1.msra.mxu0 0.0
    %432 = vmatprep.subr.mxu0 0.0
    %433 = vmatpush1.msra.mxu0 0.0
    %434 = vmatprep.subr.mxu0 0.0
    %435 = vmatpush1.msra.mxu0 0.0
    %436 = vmatprep.subr.mxu0 0.0
    %437 = vmatpush1.msra.mxu0 0.0
    %438 = vmatprep.subr.mxu0 0.0
    %439 = vmatpush1.msra.mxu0 0.0
    %440 = vmatprep.subr.mxu0 0.0
    %441 = vmatpush1.msra.mxu0 0.0
    %442 = vmatprep.subr.mxu0 0.0
    %443 = vmatpush1.msra.mxu0 0.0
    %444 = vmatprep.subr.mxu0 0.0
    %445 = vmatpush1.msra.mxu0 0.0
    %446 = vmatprep.subr.mxu0 0.0
    %447 = vmatpush1.msra.mxu0 0.0
    %448 = vmatprep.subr.mxu0 0.0
    %449 = vmatpush1.msra.mxu0 0.0
    %450 = vmatprep.subr.mxu0 0.0
    %451 = vmatpush1.msra.mxu0 0.0
    %452 = vmatprep.subr.mxu0 0.0
    %453 = vmatpush1.msra.mxu0 %v417
    %454 = vmatprep.subr.mxu0 0.0
    %455 = vmatpush2.msra.mxu0 0.0
    %456 = vmatprep.subr.mxu0 0.0
    %457 = vmatpush2.msra.mxu0 0.0
    %458 = vmatprep.subr.mxu0 0.0
    %459 = vmatpush2.msra.mxu0 0.0
    %460 = vmatprep.subr.mxu0 0.0
    %461 = vmatpush2.msra.mxu0 0.0
    %462 = vmatprep.subr.mxu0 0.0
    %463 = vmatpush2.msra.mxu0 0.0
    %464 = vmatprep.subr.mxu0 0.0
    %465 = vmatpush2.msra.mxu0 0.0
    %466 = vmatprep.subr.mxu0 0.0
    %467 = vmatpush2.msra.mxu0 0.0
    %468 = vmatprep.subr.mxu0 0.0
    %469 = vmatpush2.msra.mxu0 0.0
    %470 = vmatprep.subr.mxu0 0.0
    %471 = vmatpush2.msra.mxu0 0.0
    %472 = vmatprep.subr.mxu0 0.0
    %473 = vmatpush2.msra.mxu0 0.0
    %474 = vmatprep.subr.mxu0 0.0
    %475 = vmatpush2.msra.mxu0 0.0
    %476 = vmatprep.subr.mxu0 0.0
    %477 = vmatpush2.msra.mxu0 0.0
    %478 = vmatprep.subr.mxu0 0.0
    %479 = vmatpush2.msra.mxu0 0.0
    %480 = vmatprep.subr.mxu0 0.0
    %481 = vmatpush2.msra.mxu0 0.0
    %482 = vmatprep.subr.mxu0 0.0
    %483 = vmatpush2.msra.mxu0 0.0
    %484 = vmatprep.subr.mxu0 0.0
    %485 = vmatpush2.msra.mxu0 0.0
    %486 = vmatprep.mubr.f32.mxu0 0.0
    %487 = vmatmul.mubr.f32.gmra.mxu0 %v420
    %v488 = vpop.f32.mrf.mxu0
    %v489 = vadd.f32 0.0, %v488
    %v490 = vpop.f32.mrf.mxu0
    %491 = vdwg.mxu0
    %492 = vrot.lane.b32.xlu0 %v154, 120
    %v493 = vpop.permute.xlu0 %492
    %494 = vrot.lane.b32.xlu0 %v154, 88
    %v495 = vpop.permute.xlu0 %494
    %v496 = vsel %vm166, %v493, 0
    %v498 = vsel %vm166, %v495, 0
    %500 = vmatprep.subr.mxu0 0.0
    %501 = vmatpush1.xpose.msra.mxu0 0.0
    %502 = vmatprep.subr.mxu0 0.0
    %503 = vmatpush1.xpose.msra.mxu0 0.0
    %504 = vmatprep.subr.mxu0 0.0
    %505 = vmatpush1.xpose.msra.mxu0 0.0
    %506 = vmatprep.subr.mxu0 0.0
    %507 = vmatpush1.xpose.msra.mxu0 0.0
    %508 = vmatprep.subr.mxu0 0.0
    %509 = vmatpush1.xpose.msra.mxu0 0.0
    %510 = vmatprep.subr.mxu0 0.0
    %511 = vmatpush1.xpose.msra.mxu0 0.0
    %512 = vmatprep.subr.mxu0 0.0
    %513 = vmatpush1.xpose.msra.mxu0 0.0
    %514 = vmatprep.subr.mxu0 0.0
    %515 = vmatpush1.xpose.msra.mxu0 0.0
    %516 = vmatprep.subr.mxu0 0.0
    %517 = vmatpush1.xpose.msra.mxu0 0.0
    %518 = vmatprep.subr.mxu0 0.0
    %519 = vmatpush1.xpose.msra.mxu0 0.0
    %520 = vmatprep.subr.mxu0 0.0
    %521 = vmatpush1.xpose.msra.mxu0 0.0
    %522 = vmatprep.subr.mxu0 0.0
    %523 = vmatpush1.xpose.msra.mxu0 0.0
    %524 = vmatprep.subr.mxu0 0.0
    %525 = vmatpush1.xpose.msra.mxu0 0.0
    %526 = vmatprep.subr.mxu0 0.0
    %527 = vmatpush1.xpose.msra.mxu0 0.0
    %528 = vmatprep.subr.mxu0 0.0
    %529 = vmatpush1.xpose.msra.mxu0 0.0
    %530 = vmatprep.subr.mxu0 0.0
    %531 = vmatpush1.xpose.msra.mxu0 %v498
    %532 = vmatprep.subr.mxu0 0.0
    %533 = vmatpush2.xpose.msra.mxu0 0.0
    %534 = vmatprep.subr.mxu0 0.0
    %535 = vmatpush2.xpose.msra.mxu0 0.0
    %536 = vmatprep.subr.mxu0 0.0
    %537 = vmatpush2.xpose.msra.mxu0 0.0
    %538 = vmatprep.subr.mxu0 0.0
    %539 = vmatpush2.xpose.msra.mxu0 0.0
    %540 = vmatprep.subr.mxu0 0.0
    %541 = vmatpush2.xpose.msra.mxu0 0.0
    %542 = vmatprep.subr.mxu0 0.0
    %543 = vmatpush2.xpose.msra.mxu0 0.0
    %544 = vmatprep.subr.mxu0 0.0
    %545 = vmatpush2.xpose.msra.mxu0 0.0
    %546 = vmatprep.subr.mxu0 0.0
    %547 = vmatpush2.xpose.msra.mxu0 0.0
    %548 = vmatprep.subr.mxu0 0.0
    %549 = vmatpush2.xpose.msra.mxu0 0.0
    %550 = vmatprep.subr.mxu0 0.0
    %551 = vmatpush2.xpose.msra.mxu0 0.0
    %552 = vmatprep.subr.mxu0 0.0
    %553 = vmatpush2.xpose.msra.mxu0 0.0
    %554 = vmatprep.subr.mxu0 0.0
    %555 = vmatpush2.xpose.msra.mxu0 0.0
    %556 = vmatprep.subr.mxu0 0.0
    %557 = vmatpush2.xpose.msra.mxu0 0.0
    %558 = vmatprep.subr.mxu0 0.0
    %559 = vmatpush2.xpose.msra.mxu0 0.0
    %560 = vmatprep.subr.mxu0 0.0
    %561 = vmatpush2.xpose.msra.mxu0 0.0
    %562 = vmatprep.subr.mxu0 0.0
    %563 = vmatpush2.xpose.msra.mxu0 0.0
    %564 = vmatprep.mubr.f32.mxu0 0.0
    %565 = vmatmul.mubr.f32.gmra.mxu0 %v496
    %v566 = vpop.f32.mrf.mxu0
    %v567 = vadd.f32 %v162, %v566
    %v568 = vpop.f32.mrf.mxu0
    %569 = vdwg.mxu0
    %570 = vrot.lane.b32.xlu0 %v159, 120
    %v571 = vpop.permute.xlu0 %570
    %572 = vrot.lane.b32.xlu0 %v159, 88
    %v573 = vpop.permute.xlu0 %572
    %v574 = vsel %vm166, %v571, 0
    %v576 = vsel %vm166, %v573, 0
    %578 = vmatprep.subr.mxu0 0.0
    %579 = vmatpush1.xpose.msra.mxu0 0.0
    %580 = vmatprep.subr.mxu0 0.0
    %581 = vmatpush1.xpose.msra.mxu0 0.0
    %582 = vmatprep.subr.mxu0 0.0
    %583 = vmatpush1.xpose.msra.mxu0 0.0
    %584 = vmatprep.subr.mxu0 0.0
    %585 = vmatpush1.xpose.msra.mxu0 0.0
    %586 = vmatprep.subr.mxu0 0.0
    %587 = vmatpush1.xpose.msra.mxu0 0.0
    %588 = vmatprep.subr.mxu0 0.0
    %589 = vmatpush1.xpose.msra.mxu0 0.0
    %590 = vmatprep.subr.mxu0 0.0
    %591 = vmatpush1.xpose.msra.mxu0 0.0
    %592 = vmatprep.subr.mxu0 0.0
    %593 = vmatpush1.xpose.msra.mxu0 0.0
    %594 = vmatprep.subr.mxu0 0.0
    %595 = vmatpush1.xpose.msra.mxu0 0.0
    %596 = vmatprep.subr.mxu0 0.0
    %597 = vmatpush1.xpose.msra.mxu0 0.0
    %598 = vmatprep.subr.mxu0 0.0
    %599 = vmatpush1.xpose.msra.mxu0 0.0
    %600 = vmatprep.subr.mxu0 0.0
    %601 = vmatpush1.xpose.msra.mxu0 0.0
    %602 = vmatprep.subr.mxu0 0.0
    %603 = vmatpush1.xpose.msra.mxu0 0.0
    %604 = vmatprep.subr.mxu0 0.0
    %605 = vmatpush1.xpose.msra.mxu0 0.0
    %606 = vmatprep.subr.mxu0 0.0
    %607 = vmatpush1.xpose.msra.mxu0 0.0
    %608 = vmatprep.subr.mxu0 0.0
    %609 = vmatpush1.xpose.msra.mxu0 %v576
    %610 = vmatprep.subr.mxu0 0.0
    %611 = vmatpush2.xpose.msra.mxu0 0.0
    %612 = vmatprep.subr.mxu0 0.0
    %613 = vmatpush2.xpose.msra.mxu0 0.0
    %614 = vmatprep.subr.mxu0 0.0
    %615 = vmatpush2.xpose.msra.mxu0 0.0
    %616 = vmatprep.subr.mxu0 0.0
    %617 = vmatpush2.xpose.msra.mxu0 0.0
    %618 = vmatprep.subr.mxu0 0.0
    %619 = vmatpush2.xpose.msra.mxu0 0.0
    %620 = vmatprep.subr.mxu0 0.0
    %621 = vmatpush2.xpose.msra.mxu0 0.0
    %622 = vmatprep.subr.mxu0 0.0
    %623 = vmatpush2.xpose.msra.mxu0 0.0
    %624 = vmatprep.subr.mxu0 0.0
    %625 = vmatpush2.xpose.msra.mxu0 0.0
    %626 = vmatprep.subr.mxu0 0.0
    %627 = vmatpush2.xpose.msra.mxu0 0.0
    %628 = vmatprep.subr.mxu0 0.0
    %629 = vmatpush2.xpose.msra.mxu0 0.0
    %630 = vmatprep.subr.mxu0 0.0
    %631 = vmatpush2.xpose.msra.mxu0 0.0
    %632 = vmatprep.subr.mxu0 0.0
    %633 = vmatpush2.xpose.msra.mxu0 0.0
    %634 = vmatprep.subr.mxu0 0.0
    %635 = vmatpush2.xpose.msra.mxu0 0.0
    %636 = vmatprep.subr.mxu0 0.0
    %637 = vmatpush2.xpose.msra.mxu0 0.0
    %638 = vmatprep.subr.mxu0 0.0
    %639 = vmatpush2.xpose.msra.mxu0 0.0
    %640 = vmatprep.subr.mxu0 0.0
    %641 = vmatpush2.xpose.msra.mxu0 0.0
    %642 = vmatprep.mubr.f32.mxu0 0.0
    %643 = vmatmul.mubr.f32.gmra.mxu0 %v574
    %v644 = vpop.f32.mrf.mxu0
    %v645 = vadd.f32 %v162, %v644
    %v646 = vpop.f32.mrf.mxu0
    %647 = vdwg.mxu0
    %v648 = vsel %vm166, %v567, -inf
    %649 = vmax.xlane.f32.xlu0 %v648
    %v650 = vpop.xlane.xlu0 %649
    %v651 = vsel %vm166, %v645, -inf
    %652 = vmax.xlane.f32.xlu0 %v651
    %v653 = vpop.xlane.xlu0 %652
    %v654 = vsub.f32 %v567, %v650
    %v655 = vsub.f32 %v645, %v653
    %v656 = vmul.f32 %v654, 1.442695
    %v657 = vpow.pop %v656
    %v658 = vmul.f32 %v655, 1.442695
    %v659 = vpow.pop %v658
    %v660 = vsel %vm166, %v657, 0.0
    %661 = vadd.xlane.f32.xlu0 %v660
    %v662 = vpop.xlane.xlu0 %661
    %v663 = vsel %vm166, %v659, 0.0
    %664 = vadd.xlane.f32.xlu0 %v663
    %v665 = vpop.xlane.xlu0 %664
    %v666 = vrcp.pop %v662
    %v667 = vrcp.pop %v665
    %v668 = vmul.f32 %v657, %v666
    %v669 = vmul.f32 %v659, %v667
    %670 = vrot.lane.b32.xlu0 %v154, 56
    %v671 = vpop.permute.xlu0 %670
    %v674 = vsel %vm166, %v668, 0
    %676 = vmatprep.subr.mxu0 0.0
    %677 = vmatpush1.msra.mxu0 0.0
    %678 = vmatprep.subr.mxu0 0.0
    %679 = vmatpush1.msra.mxu0 0.0
    %680 = vmatprep.subr.mxu0 0.0
    %681 = vmatpush1.msra.mxu0 0.0
    %682 = vmatprep.subr.mxu0 0.0
    %683 = vmatpush1.msra.mxu0 0.0
    %684 = vmatprep.subr.mxu0 0.0
    %685 = vmatpush1.msra.mxu0 0.0
    %686 = vmatprep.subr.mxu0 0.0
    %687 = vmatpush1.msra.mxu0 0.0
    %688 = vmatprep.subr.mxu0 0.0
    %689 = vmatpush1.msra.mxu0 0.0
    %690 = vmatprep.subr.mxu0 0.0
    %691 = vmatpush1.msra.mxu0 0.0
    %692 = vmatprep.subr.mxu0 0.0
    %693 = vmatpush1.msra.mxu0 0.0
    %694 = vmatprep.subr.mxu0 0.0
    %695 = vmatpush1.msra.mxu0 0.0
    %696 = vmatprep.subr.mxu0 0.0
    %697 = vmatpush1.msra.mxu0 0.0
    %698 = vmatprep.subr.mxu0 0.0
    %699 = vmatpush1.msra.mxu0 0.0
    %700 = vmatprep.subr.mxu0 0.0
    %701 = vmatpush1.msra.mxu0 0.0
    %702 = vmatprep.subr.mxu0 0.0
    %703 = vmatpush1.msra.mxu0 0.0
    %704 = vmatprep.subr.mxu0 0.0
    %705 = vmatpush1.msra.mxu0 0.0
    %706 = vmatprep.subr.mxu0 0.0
    %707 = vmatpush1.msra.mxu0 %v671
    %708 = vmatprep.subr.mxu0 0.0
    %709 = vmatpush2.msra.mxu0 0.0
    %710 = vmatprep.subr.mxu0 0.0
    %711 = vmatpush2.msra.mxu0 0.0
    %712 = vmatprep.subr.mxu0 0.0
    %713 = vmatpush2.msra.mxu0 0.0
    %714 = vmatprep.subr.mxu0 0.0
    %715 = vmatpush2.msra.mxu0 0.0
    %716 = vmatprep.subr.mxu0 0.0
    %717 = vmatpush2.msra.mxu0 0.0
    %718 = vmatprep.subr.mxu0 0.0
    %719 = vmatpush2.msra.mxu0 0.0
    %720 = vmatprep.subr.mxu0 0.0
    %721 = vmatpush2.msra.mxu0 0.0
    %722 = vmatprep.subr.mxu0 0.0
    %723 = vmatpush2.msra.mxu0 0.0
    %724 = vmatprep.subr.mxu0 0.0
    %725 = vmatpush2.msra.mxu0 0.0
    %726 = vmatprep.subr.mxu0 0.0
    %727 = vmatpush2.msra.mxu0 0.0
    %728 = vmatprep.subr.mxu0 0.0
    %729 = vmatpush2.msra.mxu0 0.0
    %730 = vmatprep.subr.mxu0 0.0
    %731 = vmatpush2.msra.mxu0 0.0
    %732 = vmatprep.subr.mxu0 0.0
    %733 = vmatpush2.msra.mxu0 0.0
    %734 = vmatprep.subr.mxu0 0.0
    %735 = vmatpush2.msra.mxu0 0.0
    %736 = vmatprep.subr.mxu0 0.0
    %737 = vmatpush2.msra.mxu0 0.0
    %738 = vmatprep.subr.mxu0 0.0
    %739 = vmatpush2.msra.mxu0 0.0
    %740 = vmatprep.mubr.f32.mxu0 0.0
    %741 = vmatmul.mubr.f32.gmra.mxu0 %v674
    %v742 = vpop.f32.mrf.mxu0
    %v743 = vadd.f32 0.0, %v742
    %v744 = vpop.f32.mrf.mxu0
    %745 = vdwg.mxu0
    %746 = vrot.lane.b32.xlu0 %v159, 56
    %v747 = vpop.permute.xlu0 %746
    %v750 = vsel %vm166, %v669, 0
    %752 = vmatprep.subr.mxu0 0.0
    %753 = vmatpush1.msra.mxu0 0.0
    %754 = vmatprep.subr.mxu0 0.0
    %755 = vmatpush1.msra.mxu0 0.0
    %756 = vmatprep.subr.mxu0 0.0
    %757 = vmatpush1.msra.mxu0 0.0
    %758 = vmatprep.subr.mxu0 0.0
    %759 = vmatpush1.msra.mxu0 0.0
    %760 = vmatprep.subr.mxu0 0.0
    %761 = vmatpush1.msra.mxu0 0.0
    %762 = vmatprep.subr.mxu0 0.0
    %763 = vmatpush1.msra.mxu0 0.0
    %764 = vmatprep.subr.mxu0 0.0
    %765 = vmatpush1.msra.mxu0 0.0
    %766 = vmatprep.subr.mxu0 0.0
    %767 = vmatpush1.msra.mxu0 0.0
    %768 = vmatprep.subr.mxu0 0.0
    %769 = vmatpush1.msra.mxu0 0.0
    %770 = vmatprep.subr.mxu0 0.0
    %771 = vmatpush1.msra.mxu0 0.0
    %772 = vmatprep.subr.mxu0 0.0
    %773 = vmatpush1.msra.mxu0 0.0
    %774 = vmatprep.subr.mxu0 0.0
    %775 = vmatpush1.msra.mxu0 0.0
    %776 = vmatprep.subr.mxu0 0.0
    %777 = vmatpush1.msra.mxu0 0.0
    %778 = vmatprep.subr.mxu0 0.0
    %779 = vmatpush1.msra.mxu0 0.0
    %780 = vmatprep.subr.mxu0 0.0
    %781 = vmatpush1.msra.mxu0 0.0
    %782 = vmatprep.subr.mxu0 0.0
    %783 = vmatpush1.msra.mxu0 %v747
    %784 = vmatprep.subr.mxu0 0.0
    %785 = vmatpush2.msra.mxu0 0.0
    %786 = vmatprep.subr.mxu0 0.0
    %787 = vmatpush2.msra.mxu0 0.0
    %788 = vmatprep.subr.mxu0 0.0
    %789 = vmatpush2.msra.mxu0 0.0
    %790 = vmatprep.subr.mxu0 0.0
    %791 = vmatpush2.msra.mxu0 0.0
    %792 = vmatprep.subr.mxu0 0.0
    %793 = vmatpush2.msra.mxu0 0.0
    %794 = vmatprep.subr.mxu0 0.0
    %795 = vmatpush2.msra.mxu0 0.0
    %796 = vmatprep.subr.mxu0 0.0
    %797 = vmatpush2.msra.mxu0 0.0
    %798 = vmatprep.subr.mxu0 0.0
    %799 = vmatpush2.msra.mxu0 0.0
    %800 = vmatprep.subr.mxu0 0.0
    %801 = vmatpush2.msra.mxu0 0.0
    %802 = vmatprep.subr.mxu0 0.0
    %803 = vmatpush2.msra.mxu0 0.0
    %804 = vmatprep.subr.mxu0 0.0
    %805 = vmatpush2.msra.mxu0 0.0
    %806 = vmatprep.subr.mxu0 0.0
    %807 = vmatpush2.msra.mxu0 0.0
    %808 = vmatprep.subr.mxu0 0.0
    %809 = vmatpush2.msra.mxu0 0.0
    %810 = vmatprep.subr.mxu0 0.0
    %811 = vmatpush2.msra.mxu0 0.0
    %812 = vmatprep.subr.mxu0 0.0
    %813 = vmatpush2.msra.mxu0 0.0
    %814 = vmatprep.subr.mxu0 0.0
    %815 = vmatpush2.msra.mxu0 0.0
    %816 = vmatprep.mubr.f32.mxu0 0.0
    %817 = vmatmul.mubr.f32.gmra.mxu0 %v750
    %v818 = vpop.f32.mrf.mxu0
    %v819 = vadd.f32 0.0, %v818
    %v820 = vpop.f32.mrf.mxu0
    %821 = vdwg.mxu0
    %822 = vrot.lane.b32.xlu0 %v154, 112
    %v823 = vpop.permute.xlu0 %822
    %824 = vrot.lane.b32.xlu0 %v154, 80
    %v825 = vpop.permute.xlu0 %824
    %v826 = vsel %vm166, %v823, 0
    %v828 = vsel %vm166, %v825, 0
    %830 = vmatprep.subr.mxu0 0.0
    %831 = vmatpush1.xpose.msra.mxu0 0.0
    %832 = vmatprep.subr.mxu0 0.0
    %833 = vmatpush1.xpose.msra.mxu0 0.0
    %834 = vmatprep.subr.mxu0 0.0
    %835 = vmatpush1.xpose.msra.mxu0 0.0
    %836 = vmatprep.subr.mxu0 0.0
    %837 = vmatpush1.xpose.msra.mxu0 0.0
    %838 = vmatprep.subr.mxu0 0.0
    %839 = vmatpush1.xpose.msra.mxu0 0.0
    %840 = vmatprep.subr.mxu0 0.0
    %841 = vmatpush1.xpose.msra.mxu0 0.0
    %842 = vmatprep.subr.mxu0 0.0
    %843 = vmatpush1.xpose.msra.mxu0 0.0
    %844 = vmatprep.subr.mxu0 0.0
    %845 = vmatpush1.xpose.msra.mxu0 0.0
    %846 = vmatprep.subr.mxu0 0.0
    %847 = vmatpush1.xpose.msra.mxu0 0.0
    %848 = vmatprep.subr.mxu0 0.0
    %849 = vmatpush1.xpose.msra.mxu0 0.0
    %850 = vmatprep.subr.mxu0 0.0
    %851 = vmatpush1.xpose.msra.mxu0 0.0
    %852 = vmatprep.subr.mxu0 0.0
    %853 = vmatpush1.xpose.msra.mxu0 0.0
    %854 = vmatprep.subr.mxu0 0.0
    %855 = vmatpush1.xpose.msra.mxu0 0.0
    %856 = vmatprep.subr.mxu0 0.0
    %857 = vmatpush1.xpose.msra.mxu0 0.0
    %858 = vmatprep.subr.mxu0 0.0
    %859 = vmatpush1.xpose.msra.mxu0 0.0
    %860 = vmatprep.subr.mxu0 0.0
    %861 = vmatpush1.xpose.msra.mxu0 %v828
    %862 = vmatprep.subr.mxu0 0.0
    %863 = vmatpush2.xpose.msra.mxu0 0.0
    %864 = vmatprep.subr.mxu0 0.0
    %865 = vmatpush2.xpose.msra.mxu0 0.0
    %866 = vmatprep.subr.mxu0 0.0
    %867 = vmatpush2.xpose.msra.mxu0 0.0
    %868 = vmatprep.subr.mxu0 0.0
    %869 = vmatpush2.xpose.msra.mxu0 0.0
    %870 = vmatprep.subr.mxu0 0.0
    %871 = vmatpush2.xpose.msra.mxu0 0.0
    %872 = vmatprep.subr.mxu0 0.0
    %873 = vmatpush2.xpose.msra.mxu0 0.0
    %874 = vmatprep.subr.mxu0 0.0
    %875 = vmatpush2.xpose.msra.mxu0 0.0
    %876 = vmatprep.subr.mxu0 0.0
    %877 = vmatpush2.xpose.msra.mxu0 0.0
    %878 = vmatprep.subr.mxu0 0.0
    %879 = vmatpush2.xpose.msra.mxu0 0.0
    %880 = vmatprep.subr.mxu0 0.0
    %881 = vmatpush2.xpose.msra.mxu0 0.0
    %882 = vmatprep.subr.mxu0 0.0
    %883 = vmatpush2.xpose.msra.mxu0 0.0
    %884 = vmatprep.subr.mxu0 0.0
    %885 = vmatpush2.xpose.msra.mxu0 0.0
    %886 = vmatprep.subr.mxu0 0.0
    %887 = vmatpush2.xpose.msra.mxu0 0.0
    %888 = vmatprep.subr.mxu0 0.0
    %889 = vmatpush2.xpose.msra.mxu0 0.0
    %890 = vmatprep.subr.mxu0 0.0
    %891 = vmatpush2.xpose.msra.mxu0 0.0
    %892 = vmatprep.subr.mxu0 0.0
    %893 = vmatpush2.xpose.msra.mxu0 0.0
    %894 = vmatprep.mubr.f32.mxu0 0.0
    %895 = vmatmul.mubr.f32.gmra.mxu0 %v826
    %v896 = vpop.f32.mrf.mxu0
    %v897 = vadd.f32 %v162, %v896
    %v898 = vpop.f32.mrf.mxu0
    %899 = vdwg.mxu0
    %900 = vrot.lane.b32.xlu0 %v159, 112
    %v901 = vpop.permute.xlu0 %900
    %902 = vrot.lane.b32.xlu0 %v159, 80
    %v903 = vpop.permute.xlu0 %902
    %v904 = vsel %vm166, %v901, 0
    %v906 = vsel %vm166, %v903, 0
    %908 = vmatprep.subr.mxu0 0.0
    %909 = vmatpush1.xpose.msra.mxu0 0.0
    %910 = vmatprep.subr.mxu0 0.0
    %911 = vmatpush1.xpose.msra.mxu0 0.0
    %912 = vmatprep.subr.mxu0 0.0
    %913 = vmatpush1.xpose.msra.mxu0 0.0
    %914 = vmatprep.subr.mxu0 0.0
    %915 = vmatpush1.xpose.msra.mxu0 0.0
    %916 = vmatprep.subr.mxu0 0.0
    %917 = vmatpush1.xpose.msra.mxu0 0.0
    %918 = vmatprep.subr.mxu0 0.0
    %919 = vmatpush1.xpose.msra.mxu0 0.0
    %920 = vmatprep.subr.mxu0 0.0
    %921 = vmatpush1.xpose.msra.mxu0 0.0
    %922 = vmatprep.subr.mxu0 0.0
    %923 = vmatpush1.xpose.msra.mxu0 0.0
    %924 = vmatprep.subr.mxu0 0.0
    %925 = vmatpush1.xpose.msra.mxu0 0.0
    %926 = vmatprep.subr.mxu0 0.0
    %927 = vmatpush1.xpose.msra.mxu0 0.0
    %928 = vmatprep.subr.mxu0 0.0
    %929 = vmatpush1.xpose.msra.mxu0 0.0
    %930 = vmatprep.subr.mxu0 0.0
    %931 = vmatpush1.xpose.msra.mxu0 0.0
    %932 = vmatprep.subr.mxu0 0.0
    %933 = vmatpush1.xpose.msra.mxu0 0.0
    %934 = vmatprep.subr.mxu0 0.0
    %935 = vmatpush1.xpose.msra.mxu0 0.0
    %936 = vmatprep.subr.mxu0 0.0
    %937 = vmatpush1.xpose.msra.mxu0 0.0
    %938 = vmatprep.subr.mxu0 0.0
    %939 = vmatpush1.xpose.msra.mxu0 %v906
    %940 = vmatprep.subr.mxu0 0.0
    %941 = vmatpush2.xpose.msra.mxu0 0.0
    %942 = vmatprep.subr.mxu0 0.0
    %943 = vmatpush2.xpose.msra.mxu0 0.0
    %944 = vmatprep.subr.mxu0 0.0
    %945 = vmatpush2.xpose.msra.mxu0 0.0
    %946 = vmatprep.subr.mxu0 0.0
    %947 = vmatpush2.xpose.msra.mxu0 0.0
    %948 = vmatprep.subr.mxu0 0.0
    %949 = vmatpush2.xpose.msra.mxu0 0.0
    %950 = vmatprep.subr.mxu0 0.0
    %951 = vmatpush2.xpose.msra.mxu0 0.0
    %952 = vmatprep.subr.mxu0 0.0
    %953 = vmatpush2.xpose.msra.mxu0 0.0
    %954 = vmatprep.subr.mxu0 0.0
    %955 = vmatpush2.xpose.msra.mxu0 0.0
    %956 = vmatprep.subr.mxu0 0.0
    %957 = vmatpush2.xpose.msra.mxu0 0.0
    %958 = vmatprep.subr.mxu0 0.0
    %959 = vmatpush2.xpose.msra.mxu0 0.0
    %960 = vmatprep.subr.mxu0 0.0
    %961 = vmatpush2.xpose.msra.mxu0 0.0
    %962 = vmatprep.subr.mxu0 0.0
    %963 = vmatpush2.xpose.msra.mxu0 0.0
    %964 = vmatprep.subr.mxu0 0.0
    %965 = vmatpush2.xpose.msra.mxu0 0.0
    %966 = vmatprep.subr.mxu0 0.0
    %967 = vmatpush2.xpose.msra.mxu0 0.0
    %968 = vmatprep.subr.mxu0 0.0
    %969 = vmatpush2.xpose.msra.mxu0 0.0
    %970 = vmatprep.subr.mxu0 0.0
    %971 = vmatpush2.xpose.msra.mxu0 0.0
    %972 = vmatprep.mubr.f32.mxu0 0.0
    %973 = vmatmul.mubr.f32.gmra.mxu0 %v904
    %v974 = vpop.f32.mrf.mxu0
    %v975 = vadd.f32 %v162, %v974
    %v976 = vpop.f32.mrf.mxu0
    %977 = vdwg.mxu0
    %v978 = vsel %vm166, %v897, -inf
    %979 = vmax.xlane.f32.xlu0 %v978
    %v980 = vpop.xlane.xlu0 %979
    %v981 = vsel %vm166, %v975, -inf
    %982 = vmax.xlane.f32.xlu0 %v981
    %v983 = vpop.xlane.xlu0 %982
    %v984 = vsub.f32 %v897, %v980
    %v985 = vsub.f32 %v975, %v983
    %v986 = vmul.f32 %v984, 1.442695
    %v987 = vpow.pop %v986
    %v988 = vmul.f32 %v985, 1.442695
    %v989 = vpow.pop %v988
    %v990 = vsel %vm166, %v987, 0.0
    %991 = vadd.xlane.f32.xlu0 %v990
    %v992 = vpop.xlane.xlu0 %991
    %v993 = vsel %vm166, %v989, 0.0
    %994 = vadd.xlane.f32.xlu0 %v993
    %v995 = vpop.xlane.xlu0 %994
    %v996 = vrcp.pop %v992
    %v997 = vrcp.pop %v995
    %v998 = vmul.f32 %v987, %v996
    %v999 = vmul.f32 %v989, %v997
    %1000 = vrot.lane.b32.xlu0 %v154, 48
    %v1001 = vpop.permute.xlu0 %1000
    %v1004 = vsel %vm166, %v998, 0
    %1006 = vmatprep.subr.mxu0 0.0
    %1007 = vmatpush1.msra.mxu0 0.0
    %1008 = vmatprep.subr.mxu0 0.0
    %1009 = vmatpush1.msra.mxu0 0.0
    %1010 = vmatprep.subr.mxu0 0.0
    %1011 = vmatpush1.msra.mxu0 0.0
    %1012 = vmatprep.subr.mxu0 0.0
    %1013 = vmatpush1.msra.mxu0 0.0
    %1014 = vmatprep.subr.mxu0 0.0
    %1015 = vmatpush1.msra.mxu0 0.0
    %1016 = vmatprep.subr.mxu0 0.0
    %1017 = vmatpush1.msra.mxu0 0.0
    %1018 = vmatprep.subr.mxu0 0.0
    %1019 = vmatpush1.msra.mxu0 0.0
    %1020 = vmatprep.subr.mxu0 0.0
    %1021 = vmatpush1.msra.mxu0 0.0
    %1022 = vmatprep.subr.mxu0 0.0
    %1023 = vmatpush1.msra.mxu0 0.0
    %1024 = vmatprep.subr.mxu0 0.0
    %1025 = vmatpush1.msra.mxu0 0.0
    %1026 = vmatprep.subr.mxu0 0.0
    %1027 = vmatpush1.msra.mxu0 0.0
    %1028 = vmatprep.subr.mxu0 0.0
    %1029 = vmatpush1.msra.mxu0 0.0
    %1030 = vmatprep.subr.mxu0 0.0
    %1031 = vmatpush1.msra.mxu0 0.0
    %1032 = vmatprep.subr.mxu0 0.0
    %1033 = vmatpush1.msra.mxu0 0.0
    %1034 = vmatprep.subr.mxu0 0.0
    %1035 = vmatpush1.msra.mxu0 0.0
    %1036 = vmatprep.subr.mxu0 0.0
    %1037 = vmatpush1.msra.mxu0 %v1001
    %1038 = vmatprep.subr.mxu0 0.0
    %1039 = vmatpush2.msra.mxu0 0.0
    %1040 = vmatprep.subr.mxu0 0.0
    %1041 = vmatpush2.msra.mxu0 0.0
    %1042 = vmatprep.subr.mxu0 0.0
    %1043 = vmatpush2.msra.mxu0 0.0
    %1044 = vmatprep.subr.mxu0 0.0
    %1045 = vmatpush2.msra.mxu0 0.0
    %1046 = vmatprep.subr.mxu0 0.0
    %1047 = vmatpush2.msra.mxu0 0.0
    %1048 = vmatprep.subr.mxu0 0.0
    %1049 = vmatpush2.msra.mxu0 0.0
    %1050 = vmatprep.subr.mxu0 0.0
    %1051 = vmatpush2.msra.mxu0 0.0
    %1052 = vmatprep.subr.mxu0 0.0
    %1053 = vmatpush2.msra.mxu0 0.0
    %1054 = vmatprep.subr.mxu0 0.0
    %1055 = vmatpush2.msra.mxu0 0.0
    %1056 = vmatprep.subr.mxu0 0.0
    %1057 = vmatpush2.msra.mxu0 0.0
    %1058 = vmatprep.subr.mxu0 0.0
    %1059 = vmatpush2.msra.mxu0 0.0
    %1060 = vmatprep.subr.mxu0 0.0
    %1061 = vmatpush2.msra.mxu0 0.0
    %1062 = vmatprep.subr.mxu0 0.0
    %1063 = vmatpush2.msra.mxu0 0.0
    %1064 = vmatprep.subr.mxu0 0.0
    %1065 = vmatpush2.msra.mxu0 0.0
    %1066 = vmatprep.subr.mxu0 0.0
    %1067 = vmatpush2.msra.mxu0 0.0
    %1068 = vmatprep.subr.mxu0 0.0
    %1069 = vmatpush2.msra.mxu0 0.0
    %1070 = vmatprep.mubr.f32.mxu0 0.0
    %1071 = vmatmul.mubr.f32.gmra.mxu0 %v1004
    %v1072 = vpop.f32.mrf.mxu0
    %v1073 = vadd.f32 0.0, %v1072
    %v1074 = vpop.f32.mrf.mxu0
    %1075 = vdwg.mxu0
    %1076 = vrot.lane.b32.xlu0 %v159, 48
    %v1077 = vpop.permute.xlu0 %1076
    %v1080 = vsel %vm166, %v999, 0
    %1082 = vmatprep.subr.mxu0 0.0
    %1083 = vmatpush1.msra.mxu0 0.0
    %1084 = vmatprep.subr.mxu0 0.0
    %1085 = vmatpush1.msra.mxu0 0.0
    %1086 = vmatprep.subr.mxu0 0.0
    %1087 = vmatpush1.msra.mxu0 0.0
    %1088 = vmatprep.subr.mxu0 0.0
    %1089 = vmatpush1.msra.mxu0 0.0
    %1090 = vmatprep.subr.mxu0 0.0
    %1091 = vmatpush1.msra.mxu0 0.0
    %1092 = vmatprep.subr.mxu0 0.0
    %1093 = vmatpush1.msra.mxu0 0.0
    %1094 = vmatprep.subr.mxu0 0.0
    %1095 = vmatpush1.msra.mxu0 0.0
    %1096 = vmatprep.subr.mxu0 0.0
    %1097 = vmatpush1.msra.mxu0 0.0
    %1098 = vmatprep.subr.mxu0 0.0
    %1099 = vmatpush1.msra.mxu0 0.0
    %1100 = vmatprep.subr.mxu0 0.0
    %1101 = vmatpush1.msra.mxu0 0.0
    %1102 = vmatprep.subr.mxu0 0.0
    %1103 = vmatpush1.msra.mxu0 0.0
    %1104 = vmatprep.subr.mxu0 0.0
    %1105 = vmatpush1.msra.mxu0 0.0
    %1106 = vmatprep.subr.mxu0 0.0
    %1107 = vmatpush1.msra.mxu0 0.0
    %1108 = vmatprep.subr.mxu0 0.0
    %1109 = vmatpush1.msra.mxu0 0.0
    %1110 = vmatprep.subr.mxu0 0.0
    %1111 = vmatpush1.msra.mxu0 0.0
    %1112 = vmatprep.subr.mxu0 0.0
    %1113 = vmatpush1.msra.mxu0 %v1077
    %1114 = vmatprep.subr.mxu0 0.0
    %1115 = vmatpush2.msra.mxu0 0.0
    %1116 = vmatprep.subr.mxu0 0.0
    %1117 = vmatpush2.msra.mxu0 0.0
    %1118 = vmatprep.subr.mxu0 0.0
    %1119 = vmatpush2.msra.mxu0 0.0
    %1120 = vmatprep.subr.mxu0 0.0
    %1121 = vmatpush2.msra.mxu0 0.0
    %1122 = vmatprep.subr.mxu0 0.0
    %1123 = vmatpush2.msra.mxu0 0.0
    %1124 = vmatprep.subr.mxu0 0.0
    %1125 = vmatpush2.msra.mxu0 0.0
    %1126 = vmatprep.subr.mxu0 0.0
    %1127 = vmatpush2.msra.mxu0 0.0
    %1128 = vmatprep.subr.mxu0 0.0
    %1129 = vmatpush2.msra.mxu0 0.0
    %1130 = vmatprep.subr.mxu0 0.0
    %1131 = vmatpush2.msra.mxu0 0.0
    %1132 = vmatprep.subr.mxu0 0.0
    %1133 = vmatpush2.msra.mxu0 0.0
    %1134 = vmatprep.subr.mxu0 0.0
    %1135 = vmatpush2.msra.mxu0 0.0
    %1136 = vmatprep.subr.mxu0 0.0
    %1137 = vmatpush2.msra.mxu0 0.0
    %1138 = vmatprep.subr.mxu0 0.0
    %1139 = vmatpush2.msra.mxu0 0.0
    %1140 = vmatprep.subr.mxu0 0.0
    %1141 = vmatpush2.msra.mxu0 0.0
    %1142 = vmatprep.subr.mxu0 0.0
    %1143 = vmatpush2.msra.mxu0 0.0
    %1144 = vmatprep.subr.mxu0 0.0
    %1145 = vmatpush2.msra.mxu0 0.0
    %1146 = vmatprep.mubr.f32.mxu0 0.0
    %1147 = vmatmul.mubr.f32.gmra.mxu0 %v1080
    %v1148 = vpop.f32.mrf.mxu0
    %v1149 = vadd.f32 0.0, %v1148
    %v1150 = vpop.f32.mrf.mxu0
    %1151 = vdwg.mxu0
    %1152 = vrot.lane.b32.xlu0 %v154, 104
    %v1153 = vpop.permute.xlu0 %1152
    %1154 = vrot.lane.b32.xlu0 %v154, 72
    %v1155 = vpop.permute.xlu0 %1154
    %v1156 = vsel %vm166, %v1153, 0
    %v1158 = vsel %vm166, %v1155, 0
    %1160 = vmatprep.subr.mxu0 0.0
    %1161 = vmatpush1.xpose.msra.mxu0 0.0
    %1162 = vmatprep.subr.mxu0 0.0
    %1163 = vmatpush1.xpose.msra.mxu0 0.0
    %1164 = vmatprep.subr.mxu0 0.0
    %1165 = vmatpush1.xpose.msra.mxu0 0.0
    %1166 = vmatprep.subr.mxu0 0.0
    %1167 = vmatpush1.xpose.msra.mxu0 0.0
    %1168 = vmatprep.subr.mxu0 0.0
    %1169 = vmatpush1.xpose.msra.mxu0 0.0
    %1170 = vmatprep.subr.mxu0 0.0
    %1171 = vmatpush1.xpose.msra.mxu0 0.0
    %1172 = vmatprep.subr.mxu0 0.0
    %1173 = vmatpush1.xpose.msra.mxu0 0.0
    %1174 = vmatprep.subr.mxu0 0.0
    %1175 = vmatpush1.xpose.msra.mxu0 0.0
    %1176 = vmatprep.subr.mxu0 0.0
    %1177 = vmatpush1.xpose.msra.mxu0 0.0
    %1178 = vmatprep.subr.mxu0 0.0
    %1179 = vmatpush1.xpose.msra.mxu0 0.0
    %1180 = vmatprep.subr.mxu0 0.0
    %1181 = vmatpush1.xpose.msra.mxu0 0.0
    %1182 = vmatprep.subr.mxu0 0.0
    %1183 = vmatpush1.xpose.msra.mxu0 0.0
    %1184 = vmatprep.subr.mxu0 0.0
    %1185 = vmatpush1.xpose.msra.mxu0 0.0
    %1186 = vmatprep.subr.mxu0 0.0
    %1187 = vmatpush1.xpose.msra.mxu0 0.0
    %1188 = vmatprep.subr.mxu0 0.0
    %1189 = vmatpush1.xpose.msra.mxu0 0.0
    %1190 = vmatprep.subr.mxu0 0.0
    %1191 = vmatpush1.xpose.msra.mxu0 %v1158
    %1192 = vmatprep.subr.mxu0 0.0
    %1193 = vmatpush2.xpose.msra.mxu0 0.0
    %1194 = vmatprep.subr.mxu0 0.0
    %1195 = vmatpush2.xpose.msra.mxu0 0.0
    %1196 = vmatprep.subr.mxu0 0.0
    %1197 = vmatpush2.xpose.msra.mxu0 0.0
    %1198 = vmatprep.subr.mxu0 0.0
    %1199 = vmatpush2.xpose.msra.mxu0 0.0
    %1200 = vmatprep.subr.mxu0 0.0
    %1201 = vmatpush2.xpose.msra.mxu0 0.0
    %1202 = vmatprep.subr.mxu0 0.0
    %1203 = vmatpush2.xpose.msra.mxu0 0.0
    %1204 = vmatprep.subr.mxu0 0.0
    %1205 = vmatpush2.xpose.msra.mxu0 0.0
    %1206 = vmatprep.subr.mxu0 0.0
    %1207 = vmatpush2.xpose.msra.mxu0 0.0
    %1208 = vmatprep.subr.mxu0 0.0
    %1209 = vmatpush2.xpose.msra.mxu0 0.0
    %1210 = vmatprep.subr.mxu0 0.0
    %1211 = vmatpush2.xpose.msra.mxu0 0.0
    %1212 = vmatprep.subr.mxu0 0.0
    %1213 = vmatpush2.xpose.msra.mxu0 0.0
    %1214 = vmatprep.subr.mxu0 0.0
    %1215 = vmatpush2.xpose.msra.mxu0 0.0
    %1216 = vmatprep.subr.mxu0 0.0
    %1217 = vmatpush2.xpose.msra.mxu0 0.0
    %1218 = vmatprep.subr.mxu0 0.0
    %1219 = vmatpush2.xpose.msra.mxu0 0.0
    %1220 = vmatprep.subr.mxu0 0.0
    %1221 = vmatpush2.xpose.msra.mxu0 0.0
    %1222 = vmatprep.subr.mxu0 0.0
    %1223 = vmatpush2.xpose.msra.mxu0 0.0
    %1224 = vmatprep.mubr.f32.mxu0 0.0
    %1225 = vmatmul.mubr.f32.gmra.mxu0 %v1156
    %v1226 = vpop.f32.mrf.mxu0
    %v1227 = vadd.f32 %v162, %v1226
    %v1228 = vpop.f32.mrf.mxu0
    %1229 = vdwg.mxu0
    %1230 = vrot.lane.b32.xlu0 %v159, 104
    %v1231 = vpop.permute.xlu0 %1230
    %1232 = vrot.lane.b32.xlu0 %v159, 72
    %v1233 = vpop.permute.xlu0 %1232
    %v1234 = vsel %vm166, %v1231, 0
    %v1236 = vsel %vm166, %v1233, 0
    %1238 = vmatprep.subr.mxu0 0.0
    %1239 = vmatpush1.xpose.msra.mxu0 0.0
    %1240 = vmatprep.subr.mxu0 0.0
    %1241 = vmatpush1.xpose.msra.mxu0 0.0
    %1242 = vmatprep.subr.mxu0 0.0
    %1243 = vmatpush1.xpose.msra.mxu0 0.0
    %1244 = vmatprep.subr.mxu0 0.0
    %1245 = vmatpush1.xpose.msra.mxu0 0.0
    %1246 = vmatprep.subr.mxu0 0.0
    %1247 = vmatpush1.xpose.msra.mxu0 0.0
    %1248 = vmatprep.subr.mxu0 0.0
    %1249 = vmatpush1.xpose.msra.mxu0 0.0
    %1250 = vmatprep.subr.mxu0 0.0
    %1251 = vmatpush1.xpose.msra.mxu0 0.0
    %1252 = vmatprep.subr.mxu0 0.0
    %1253 = vmatpush1.xpose.msra.mxu0 0.0
    %1254 = vmatprep.subr.mxu0 0.0
    %1255 = vmatpush1.xpose.msra.mxu0 0.0
    %1256 = vmatprep.subr.mxu0 0.0
    %1257 = vmatpush1.xpose.msra.mxu0 0.0
    %1258 = vmatprep.subr.mxu0 0.0
    %1259 = vmatpush1.xpose.msra.mxu0 0.0
    %1260 = vmatprep.subr.mxu0 0.0
    %1261 = vmatpush1.xpose.msra.mxu0 0.0
    %1262 = vmatprep.subr.mxu0 0.0
    %1263 = vmatpush1.xpose.msra.mxu0 0.0
    %1264 = vmatprep.subr.mxu0 0.0
    %1265 = vmatpush1.xpose.msra.mxu0 0.0
    %1266 = vmatprep.subr.mxu0 0.0
    %1267 = vmatpush1.xpose.msra.mxu0 0.0
    %1268 = vmatprep.subr.mxu0 0.0
    %1269 = vmatpush1.xpose.msra.mxu0 %v1236
    %1270 = vmatprep.subr.mxu0 0.0
    %1271 = vmatpush2.xpose.msra.mxu0 0.0
    %1272 = vmatprep.subr.mxu0 0.0
    %1273 = vmatpush2.xpose.msra.mxu0 0.0
    %1274 = vmatprep.subr.mxu0 0.0
    %1275 = vmatpush2.xpose.msra.mxu0 0.0
    %1276 = vmatprep.subr.mxu0 0.0
    %1277 = vmatpush2.xpose.msra.mxu0 0.0
    %1278 = vmatprep.subr.mxu0 0.0
    %1279 = vmatpush2.xpose.msra.mxu0 0.0
    %1280 = vmatprep.subr.mxu0 0.0
    %1281 = vmatpush2.xpose.msra.mxu0 0.0
    %1282 = vmatprep.subr.mxu0 0.0
    %1283 = vmatpush2.xpose.msra.mxu0 0.0
    %1284 = vmatprep.subr.mxu0 0.0
    %1285 = vmatpush2.xpose.msra.mxu0 0.0
    %1286 = vmatprep.subr.mxu0 0.0
    %1287 = vmatpush2.xpose.msra.mxu0 0.0
    %1288 = vmatprep.subr.mxu0 0.0
    %1289 = vmatpush2.xpose.msra.mxu0 0.0
    %1290 = vmatprep.subr.mxu0 0.0
    %1291 = vmatpush2.xpose.msra.mxu0 0.0
    %1292 = vmatprep.subr.mxu0 0.0
    %1293 = vmatpush2.xpose.msra.mxu0 0.0
    %1294 = vmatprep.subr.mxu0 0.0
    %1295 = vmatpush2.xpose.msra.mxu0 0.0
    %1296 = vmatprep.subr.mxu0 0.0
    %1297 = vmatpush2.xpose.msra.mxu0 0.0
    %1298 = vmatprep.subr.mxu0 0.0
    %1299 = vmatpush2.xpose.msra.mxu0 0.0
    %1300 = vmatprep.subr.mxu0 0.0
    %1301 = vmatpush2.xpose.msra.mxu0 0.0
    %1302 = vmatprep.mubr.f32.mxu0 0.0
    %1303 = vmatmul.mubr.f32.gmra.mxu0 %v1234
    %v1304 = vpop.f32.mrf.mxu0
    %v1305 = vadd.f32 %v162, %v1304
    %v1306 = vpop.f32.mrf.mxu0
    %1307 = vdwg.mxu0
    %v1308 = vsel %vm166, %v1227, -inf
    %1309 = vmax.xlane.f32.xlu0 %v1308
    %v1310 = vpop.xlane.xlu0 %1309
    %v1311 = vsel %vm166, %v1305, -inf
    %1312 = vmax.xlane.f32.xlu0 %v1311
    %v1313 = vpop.xlane.xlu0 %1312
    %v1314 = vsub.f32 %v1227, %v1310
    %v1315 = vsub.f32 %v1305, %v1313
    %v1316 = vmul.f32 %v1314, 1.442695
    %v1317 = vpow.pop %v1316
    %v1318 = vmul.f32 %v1315, 1.442695
    %v1319 = vpow.pop %v1318
    %v1320 = vsel %vm166, %v1317, 0.0
    %1321 = vadd.xlane.f32.xlu0 %v1320
    %v1322 = vpop.xlane.xlu0 %1321
    %v1323 = vsel %vm166, %v1319, 0.0
    %1324 = vadd.xlane.f32.xlu0 %v1323
    %v1325 = vpop.xlane.xlu0 %1324
    %v1326 = vrcp.pop %v1322
    %v1327 = vrcp.pop %v1325
    %v1328 = vmul.f32 %v1317, %v1326
    %v1329 = vmul.f32 %v1319, %v1327
    %1330 = vrot.lane.b32.xlu0 %v154, 40
    %v1331 = vpop.permute.xlu0 %1330
    %v1334 = vsel %vm166, %v1328, 0
    %1336 = vmatprep.subr.mxu0 0.0
    %1337 = vmatpush1.msra.mxu0 0.0
    %1338 = vmatprep.subr.mxu0 0.0
    %1339 = vmatpush1.msra.mxu0 0.0
    %1340 = vmatprep.subr.mxu0 0.0
    %1341 = vmatpush1.msra.mxu0 0.0
    %1342 = vmatprep.subr.mxu0 0.0
    %1343 = vmatpush1.msra.mxu0 0.0
    %1344 = vmatprep.subr.mxu0 0.0
    %1345 = vmatpush1.msra.mxu0 0.0
    %1346 = vmatprep.subr.mxu0 0.0
    %1347 = vmatpush1.msra.mxu0 0.0
    %1348 = vmatprep.subr.mxu0 0.0
    %1349 = vmatpush1.msra.mxu0 0.0
    %1350 = vmatprep.subr.mxu0 0.0
    %1351 = vmatpush1.msra.mxu0 0.0
    %1352 = vmatprep.subr.mxu0 0.0
    %1353 = vmatpush1.msra.mxu0 0.0
    %1354 = vmatprep.subr.mxu0 0.0
    %1355 = vmatpush1.msra.mxu0 0.0
    %1356 = vmatprep.subr.mxu0 0.0
    %1357 = vmatpush1.msra.mxu0 0.0
    %1358 = vmatprep.subr.mxu0 0.0
    %1359 = vmatpush1.msra.mxu0 0.0
    %1360 = vmatprep.subr.mxu0 0.0
    %1361 = vmatpush1.msra.mxu0 0.0
    %1362 = vmatprep.subr.mxu0 0.0
    %1363 = vmatpush1.msra.mxu0 0.0
    %1364 = vmatprep.subr.mxu0 0.0
    %1365 = vmatpush1.msra.mxu0 0.0
    %1366 = vmatprep.subr.mxu0 0.0
    %1367 = vmatpush1.msra.mxu0 %v1331
    %1368 = vmatprep.subr.mxu0 0.0
    %1369 = vmatpush2.msra.mxu0 0.0
    %1370 = vmatprep.subr.mxu0 0.0
    %1371 = vmatpush2.msra.mxu0 0.0
    %1372 = vmatprep.subr.mxu0 0.0
    %1373 = vmatpush2.msra.mxu0 0.0
    %1374 = vmatprep.subr.mxu0 0.0
    %1375 = vmatpush2.msra.mxu0 0.0
    %1376 = vmatprep.subr.mxu0 0.0
    %1377 = vmatpush2.msra.mxu0 0.0
    %1378 = vmatprep.subr.mxu0 0.0
    %1379 = vmatpush2.msra.mxu0 0.0
    %1380 = vmatprep.subr.mxu0 0.0
    %1381 = vmatpush2.msra.mxu0 0.0
    %1382 = vmatprep.subr.mxu0 0.0
    %1383 = vmatpush2.msra.mxu0 0.0
    %1384 = vmatprep.subr.mxu0 0.0
    %1385 = vmatpush2.msra.mxu0 0.0
    %1386 = vmatprep.subr.mxu0 0.0
    %1387 = vmatpush2.msra.mxu0 0.0
    %1388 = vmatprep.subr.mxu0 0.0
    %1389 = vmatpush2.msra.mxu0 0.0
    %1390 = vmatprep.subr.mxu0 0.0
    %1391 = vmatpush2.msra.mxu0 0.0
    %1392 = vmatprep.subr.mxu0 0.0
    %1393 = vmatpush2.msra.mxu0 0.0
    %1394 = vmatprep.subr.mxu0 0.0
    %1395 = vmatpush2.msra.mxu0 0.0
    %1396 = vmatprep.subr.mxu0 0.0
    %1397 = vmatpush2.msra.mxu0 0.0
    %1398 = vmatprep.subr.mxu0 0.0
    %1399 = vmatpush2.msra.mxu0 0.0
    %1400 = vmatprep.mubr.f32.mxu0 0.0
    %1401 = vmatmul.mubr.f32.gmra.mxu0 %v1334
    %v1402 = vpop.f32.mrf.mxu0
    %v1403 = vadd.f32 0.0, %v1402
    %v1404 = vpop.f32.mrf.mxu0
    %1405 = vdwg.mxu0
    %1406 = vrot.lane.b32.xlu0 %v159, 40
    %v1407 = vpop.permute.xlu0 %1406
    %v1410 = vsel %vm166, %v1329, 0
    %1412 = vmatprep.subr.mxu0 0.0
    %1413 = vmatpush1.msra.mxu0 0.0
    %1414 = vmatprep.subr.mxu0 0.0
    %1415 = vmatpush1.msra.mxu0 0.0
    %1416 = vmatprep.subr.mxu0 0.0
    %1417 = vmatpush1.msra.mxu0 0.0
    %1418 = vmatprep.subr.mxu0 0.0
    %1419 = vmatpush1.msra.mxu0 0.0
    %1420 = vmatprep.subr.mxu0 0.0
    %1421 = vmatpush1.msra.mxu0 0.0
    %1422 = vmatprep.subr.mxu0 0.0
    %1423 = vmatpush1.msra.mxu0 0.0
    %1424 = vmatprep.subr.mxu0 0.0
    %1425 = vmatpush1.msra.mxu0 0.0
    %1426 = vmatprep.subr.mxu0 0.0
    %1427 = vmatpush1.msra.mxu0 0.0
    %1428 = vmatprep.subr.mxu0 0.0
    %1429 = vmatpush1.msra.mxu0 0.0
    %1430 = vmatprep.subr.mxu0 0.0
    %1431 = vmatpush1.msra.mxu0 0.0
    %1432 = vmatprep.subr.mxu0 0.0
    %1433 = vmatpush1.msra.mxu0 0.0
    %1434 = vmatprep.subr.mxu0 0.0
    %1435 = vmatpush1.msra.mxu0 0.0
    %1436 = vmatprep.subr.mxu0 0.0
    %1437 = vmatpush1.msra.mxu0 0.0
    %1438 = vmatprep.subr.mxu0 0.0
    %1439 = vmatpush1.msra.mxu0 0.0
    %1440 = vmatprep.subr.mxu0 0.0
    %1441 = vmatpush1.msra.mxu0 0.0
    %1442 = vmatprep.subr.mxu0 0.0
    %1443 = vmatpush1.msra.mxu0 %v1407
    %1444 = vmatprep.subr.mxu0 0.0
    %1445 = vmatpush2.msra.mxu0 0.0
    %1446 = vmatprep.subr.mxu0 0.0
    %1447 = vmatpush2.msra.mxu0 0.0
    %1448 = vmatprep.subr.mxu0 0.0
    %1449 = vmatpush2.msra.mxu0 0.0
    %1450 = vmatprep.subr.mxu0 0.0
    %1451 = vmatpush2.msra.mxu0 0.0
    %1452 = vmatprep.subr.mxu0 0.0
    %1453 = vmatpush2.msra.mxu0 0.0
    %1454 = vmatprep.subr.mxu0 0.0
    %1455 = vmatpush2.msra.mxu0 0.0
    %1456 = vmatprep.subr.mxu0 0.0
    %1457 = vmatpush2.msra.mxu0 0.0
    %1458 = vmatprep.subr.mxu0 0.0
    %1459 = vmatpush2.msra.mxu0 0.0
    %1460 = vmatprep.subr.mxu0 0.0
    %1461 = vmatpush2.msra.mxu0 0.0
    %1462 = vmatprep.subr.mxu0 0.0
    %1463 = vmatpush2.msra.mxu0 0.0
    %1464 = vmatprep.subr.mxu0 0.0
    %1465 = vmatpush2.msra.mxu0 0.0
    %1466 = vmatprep.subr.mxu0 0.0
    %1467 = vmatpush2.msra.mxu0 0.0
    %1468 = vmatprep.subr.mxu0 0.0
    %1469 = vmatpush2.msra.mxu0 0.0
    %1470 = vmatprep.subr.mxu0 0.0
    %1471 = vmatpush2.msra.mxu0 0.0
    %1472 = vmatprep.subr.mxu0 0.0
    %1473 = vmatpush2.msra.mxu0 0.0
    %1474 = vmatprep.subr.mxu0 0.0
    %1475 = vmatpush2.msra.mxu0 0.0
    %1476 = vmatprep.mubr.f32.mxu0 0.0
    %1477 = vmatmul.mubr.f32.gmra.mxu0 %v1410
    %v1478 = vpop.f32.mrf.mxu0
    %v1479 = vadd.f32 0.0, %v1478
    %v1480 = vpop.f32.mrf.mxu0
    %1481 = vdwg.mxu0
    %1484 = vrot.lane.b32.xlu0 %v743, 8
    %v1485 = vpop.permute.xlu0 %1484
    %1486 = vrot.lane.b32.xlu0 %v819, 8
    %v1487 = vpop.permute.xlu0 %1486
    %1492 = vrot.lane.b32.xlu0 %v1073, 16
    %v1493 = vpop.permute.xlu0 %1492
    %1494 = vrot.lane.b32.xlu0 %v1149, 16
    %v1495 = vpop.permute.xlu0 %1494
    %1500 = vrot.lane.b32.xlu0 %v1403, 24
    %v1501 = vpop.permute.xlu0 %1500
    %1502 = vrot.lane.b32.xlu0 %v1479, 24
    %v1503 = vpop.permute.xlu0 %1502
    %v1506 = vsel %vm166, %v413, %v1485
    %v1507 = vsel %vm166, %v489, %v1487
    %vm1508 = vcmask 130048
    %v1509 = vsel %vm1508, %v1506, %v1493
    %v1510 = vsel %vm1508, %v1507, %v1495
    %vm1511 = vcmask 195584
    %v1512 = vsel %vm1511, %v1509, %v1501
    %v1513 = vsel %vm1511, %v1510, %v1503
    %v1514 = vld [vmem:[#allocation7] sm:$0xff]
    %v1515 = vld [vmem:[#allocation7 + $0x8] sm:$0xff]
    %v1516 = vld [vmem:[#allocation7 + $0x10] sm:$0xff]
    %v1517 = vld [vmem:[#allocation7 + $0x18] sm:$0xff]
    %v1518 = vld [vmem:[%s3] sm:$0x1]
    %v1520 = vlaneseq
    %v1521 = vshrl.u32 %v1520, 7
    %v1522 = vsub.s32 0, %v1521
    %v1523 = vrot.slane %v1518, %v1522
    %v1526 = vsel %vm80, %v1512, 0
    %v1529 = vsel %vm80, %v1513, 0
    %1531 = vmatprep.subr.mxu0 0.0
    %1532 = vmatpush1.msra.mxu0 0.0
    %1533 = vmatprep.subr.mxu0 0.0
    %1534 = vmatpush1.msra.mxu0 0.0
    %1535 = vmatprep.subr.mxu0 0.0
    %1536 = vmatpush1.msra.mxu0 0.0
    %1537 = vmatprep.subr.mxu0 0.0
    %1538 = vmatpush1.msra.mxu0 0.0
    %1539 = vmatprep.subr.mxu0 0.0
    %1540 = vmatpush1.msra.mxu0 0.0
    %1541 = vmatprep.subr.mxu0 0.0
    %1542 = vmatpush1.msra.mxu0 0.0
    %1543 = vmatprep.subr.mxu0 0.0
    %1544 = vmatpush1.msra.mxu0 0.0
    %1545 = vmatprep.subr.mxu0 0.0
    %1546 = vmatpush1.msra.mxu0 0.0
    %1547 = vmatprep.subr.mxu0 0.0
    %1548 = vmatpush1.msra.mxu0 0.0
    %1549 = vmatprep.subr.mxu0 0.0
    %1550 = vmatpush1.msra.mxu0 0.0
    %1551 = vmatprep.subr.mxu0 0.0
    %1552 = vmatpush1.msra.mxu0 0.0
    %1553 = vmatprep.subr.mxu0 0.0
    %1554 = vmatpush1.msra.mxu0 0.0
    %1555 = vmatprep.subr.mxu0 0.0
    %1556 = vmatpush1.msra.mxu0 %v1517
    %1557 = vmatprep.subr.mxu0 0.0
    %1558 = vmatpush1.msra.mxu0 %v1516
    %1559 = vmatprep.subr.mxu0 0.0
    %1560 = vmatpush1.msra.mxu0 %v1515
    %1561 = vmatprep.subr.mxu0 0.0
    %1562 = vmatpush1.msra.mxu0 %v1514
    %1563 = vmatprep.subr.mxu0 0.0
    %1564 = vmatpush2.msra.mxu0 0.0
    %1565 = vmatprep.subr.mxu0 0.0
    %1566 = vmatpush2.msra.mxu0 0.0
    %1567 = vmatprep.subr.mxu0 0.0
    %1568 = vmatpush2.msra.mxu0 0.0
    %1569 = vmatprep.subr.mxu0 0.0
    %1570 = vmatpush2.msra.mxu0 0.0
    %1571 = vmatprep.subr.mxu0 0.0
    %1572 = vmatpush2.msra.mxu0 0.0
    %1573 = vmatprep.subr.mxu0 0.0
    %1574 = vmatpush2.msra.mxu0 0.0
    %1575 = vmatprep.subr.mxu0 0.0
    %1576 = vmatpush2.msra.mxu0 0.0
    %1577 = vmatprep.subr.mxu0 0.0
    %1578 = vmatpush2.msra.mxu0 0.0
    %1579 = vmatprep.subr.mxu0 0.0
    %1580 = vmatpush2.msra.mxu0 0.0
    %1581 = vmatprep.subr.mxu0 0.0
    %1582 = vmatpush2.msra.mxu0 0.0
    %1583 = vmatprep.subr.mxu0 0.0
    %1584 = vmatpush2.msra.mxu0 0.0
    %1585 = vmatprep.subr.mxu0 0.0
    %1586 = vmatpush2.msra.mxu0 0.0
    %1587 = vmatprep.subr.mxu0 0.0
    %1588 = vmatpush2.msra.mxu0 0.0
    %1589 = vmatprep.subr.mxu0 0.0
    %1590 = vmatpush2.msra.mxu0 0.0
    %1591 = vmatprep.subr.mxu0 0.0
    %1592 = vmatpush2.msra.mxu0 0.0
    %1593 = vmatprep.subr.mxu0 0.0
    %1594 = vmatpush2.msra.mxu0 0.0
    %1595 = vmatprep.mubr.f32.mxu0 0.0
    %1596 = vmatmul.mubr.f32.gmra.mxu0 %v1526
    %v1597 = vpop.f32.mrf.mxu0
    %v1598 = vadd.f32 %v1523, %v1597
    %v1599 = vpop.f32.mrf.mxu0
    %1600 = vmatprep.mubr.f32.mxu0 0.0
    %1601 = vmatmul.mubr.f32.gmra.mxu0 %v1529
    %v1602 = vpop.f32.mrf.mxu0
    %v1603 = vadd.f32 %v1523, %v1602
    %v1604 = vpop.f32.mrf.mxu0
    %1605 = vdwg.mxu0
    %1606 = vst.msk [vmem:[#allocation10] sm:$0xff] %vm80, %v1598
    %1607 = vst.msk [vmem:[#allocation10 + $0x8] sm:$0xff] %vm80, %v1603
    // Predicated region
    $region38: #{tpu_custom_call.1} parent=1 // pred_check
      _
    $region39: #{tpu_custom_call.1} parent=1 // pred_check_branch
      %1609 = sbr.rel (0) target = $region41
    $region40: #{tpu_custom_call.1} parent=1 // pred_region
      %s1611 = ssub.s32 256, 256
      %1612 = vsyncadd [#allocation4], %s1611
      %s1613 = sshll.u32 [#allocation10], 4
      %s1614 = int_to_ptr.vmem [resolvable:$true] %s1613
      %1619 = dma.vmem_to_hbm [thread:$0]  %s1614, 256, %s5, [#allocation4], 128, 128, 8
    $region41: #{tpu_custom_call.1} parent=1 // pred_fallthru
      _
    // Predicated region
    $region42: #{tpu_custom_call.1} parent=1 // pred_check
      _
    $region43: #{tpu_custom_call.1} parent=1 // pred_check_branch
      %1621 = sbr.rel (0) target = $region45
    $region44: #{tpu_custom_call.1} parent=1 // pred_region
      %1622 = dma.done [#allocation4], 256
    $region45: #{tpu_custom_call.1} parent=1 // pred_fallthru
      _
    %1623 = vsyncpa [#allocation3], 1
    %1624 = vsyncpa [#allocation6], 1
    %1625 = vsyncpa [#allocation9], 1
    %1626 = vsyncpa [#allocation4], 1

</llo_original>
